<compile_context>
chip_gen: v5e
topology: v5e:2x2
jax: 0.10.0
libtpu: 0.0.40
codegen_flags: <defaults>
</compile_context>

<pallas_src>
import jax
import jax.numpy as jnp
import numpy as np
from jax.experimental import pallas as pl
from jax.experimental.pallas import tpu as pltpu


def _round_up(x, m):
    return (x + m - 1) // m * m


# ----------------------------------------------------------------------------
# Fused Pallas kernel: conv1 -> ReLU -> conv2 -> ReLU -> flatten -> fc
# All operands are full-array VMEM blocks (no grid); intermediates stay in
# registers / VMEM scratch.
# ----------------------------------------------------------------------------
def _embedding_net_kernel(x_ref, r1_ref, w1_ref, s2_ref, w2_ref, b2_ref,
                          fcs_ref, fcb_ref, o_ref, h2_scr):
    n_taps = r1_ref.shape[0]      # 9 (3x3 kernel taps)
    n_pos = fcs_ref.shape[0]      # 9 (conv2 output spatial positions)

    x = x_ref[...]                # (H*W, Cp) pixels-major input (+ ones column)

    # ---- conv1 + ReLU (bias folded via the constant-1 input column) --------
    # Per tap: select the strided input pixels with a constant 0/1 matrix, then
    # apply that tap's (Cin -> 32) weights.  Output layout: (spatial, channel).
    h1 = None
    for t in range(n_taps):
        sel = jnp.dot(r1_ref[t], x, preferred_element_type=jnp.float32)      # (S1p, Cp)
        part = jnp.dot(sel, w1_ref[t], preferred_element_type=jnp.float32)   # (S1p, 32)
        h1 = part if h1 is None else h1 + part
    h1 = jnp.maximum(h1, 0.0)     # padded spatial rows stay exactly 0

    # ---- conv2 + ReLU -------------------------------------------------------
    h2 = None
    for t in range(n_taps):
        sel = jnp.dot(s2_ref[t], h1, preferred_element_type=jnp.float32)     # (S2p, 32)
        part = jnp.dot(sel, w2_ref[t], preferred_element_type=jnp.float32)   # (S2p, 64)
        h2 = part if h2 is None else h2 + part
    h2 = jnp.maximum(h2 + b2_ref[...], 0.0)   # rows >= n_pos are padding (unused below)

    # ---- fc on the NCHW-flattened conv2 output ------------------------------
    # fcs_ref[p] holds the fc-weight rows for flat indices {oc*n_pos + p}, so
    # summing per-position GEMMs reproduces `state.view(1, -1) @ fc_w + fc_b`
    # with no in-kernel transpose/reshape.
    h2_scr[...] = h2
    out = fcb_ref[...]                                        # (1, E)
    for p in range(n_pos):
        row = h2_scr[pl.ds(p, 1), :]                          # (1, 64)
        out = out + jnp.dot(row, fcs_ref[p], preferred_element_type=jnp.float32)
    o_ref[...] = out


# ----------------------------------------------------------------------------
# One-time parameter preparation (hoisted out of the hot path).
# ----------------------------------------------------------------------------
def prepare_kernel_params(params, input_shape, embedded_size):
    C, H, W = input_shape
    K, S = 3, 2
    OH1, OW1 = (H - K) // S + 1, (W - K) // S + 1
    OH2, OW2 = (OH1 - K) // S + 1, (OW1 - K) // S + 1
    S1, S2n = OH1 * OW1, OH2 * OW2
    S1p, S2p = _round_up(S1, 8), _round_up(S2n, 8)
    NPIX = H * W
    CP = _round_up(C + 1, 128)          # channels + ones column, lane-aligned
    OC1, OC2 = 32, 64
    E = embedded_size

    w1 = np.asarray(params["conv1_w"], np.float32)   # (32, C, 3, 3)
    b1 = np.asarray(params["conv1_b"], np.float32)
    w2 = np.asarray(params["conv2_w"], np.float32)   # (64, 32, 3, 3)
    b2 = np.asarray(params["conv2_b"], np.float32)
    fw = np.asarray(params["fc_w"], np.float32)      # (OC2*S2n, E)
    fb = np.asarray(params["fc_b"], np.float32)

    # conv1: per-tap pixel-selection matrices + per-tap weights (bias in tap 0).
    r1 = np.zeros((K * K, S1p, NPIX), np.float32)
    w1t = np.zeros((K * K, CP, OC1), np.float32)
    for kh in range(K):
        for kw in range(K):
            t = kh * K + kw
            for oh in range(OH1):
                for ow in range(OW1):
                    r1[t, oh * OW1 + ow, (S * oh + kh) * W + (S * ow + kw)] = 1.0
            w1t[t, :C, :] = w1[:, :, kh, kw].T
    w1t[0, C, :] = b1     # folded bias: picked up by the ones column of x_pix

    # conv2: per-tap selection over conv1's (spatial, channel) output + weights.
    s2 = np.zeros((K * K, S2p, S1p), np.float32)
    w2t = np.zeros((K * K, OC1, OC2), np.float32)
    for kh in range(K):
        for kw in range(K):
            t = kh * K + kw
            for oh in range(OH2):
                for ow in range(OW2):
                    s2[t, oh * OW2 + ow, (S * oh + kh) * OW1 + (S * ow + kw)] = 1.0
            w2t[t] = w2[:, :, kh, kw].T

    # fc: permute rows so per-position slabs match the NCHW flatten (oc, oh, ow).
    fcs = np.ascontiguousarray(fw.reshape(OC2, S2n, E).transpose(1, 0, 2))  # (S2n, OC2, E)

    return {
        "R1": jnp.asarray(r1),
        "W1T": jnp.asarray(w1t),
        "S2": jnp.asarray(s2),
        "W2T": jnp.asarray(w2t),
        "b2": jnp.asarray(b2.reshape(1, OC2)),
        "FCS": jnp.asarray(fcs),
        "fcb": jnp.asarray(fb.reshape(1, E)),
    }


# ----------------------------------------------------------------------------
# Forward (batch = 1, as implied by state.view(1, -1) in the PyTorch module).
# ----------------------------------------------------------------------------
@jax.jit
def embedding_net_forward(state, kparams):
    _, C, H, W = state.shape
    CP = kparams["W1T"].shape[1]
    S2p = kparams["S2"].shape[1]
    OC2 = kparams["W2T"].shape[2]
    E = kparams["FCS"].shape[2]

    # Pixels-major input with a constant-1 bias column: the only per-forward
    # prep outside the kernel (a single tiny fused XLA op on a 4 KB tensor).
    xt = state.reshape(C, H * W).T.astype(jnp.float32)          # (H*W, C)
    x_pix = jnp.zeros((H * W, CP), jnp.float32)
    x_pix = x_pix.at[:, :C].set(xt).at[:, C].set(1.0)

    return pl.pallas_call(
        _embedding_net_kernel,
        out_shape=jax.ShapeDtypeStruct((1, E), jnp.float32),
        scratch_shapes=[pltpu.VMEM((S2p, OC2), jnp.float32)],
    )(x_pix, kparams["R1"], kparams["W1T"], kparams["S2"], kparams["W2T"],
      kparams["b2"], kparams["FCS"], kparams["fcb"])


# ----------------------------------------------------------------------------
# Deterministic parameter init (shapes match nn.Conv2d / nn.Linear in __init__)
# ----------------------------------------------------------------------------
def init_params(key, input_shape, embedded_size):
    C, H, W = input_shape
    oh1, ow1 = (H - 3) // 2 + 1, (W - 3) // 2 + 1
    oh2, ow2 = (oh1 - 3) // 2 + 1, (ow1 - 3) // 2 + 1
    feat = 64 * oh2 * ow2  # == EmbeddingNet.feature_size()

    k1, k2, k3, k4, k5, k6 = jax.random.split(key, 6)
    return {
        "conv1_w": jax.random.normal(k1, (32, C, 3, 3), jnp.float32) * 0.10,
        "conv1_b": jax.random.normal(k2, (32,), jnp.float32) * 0.10,
        "conv2_w": jax.random.normal(k3, (64, 32, 3, 3), jnp.float32) * 0.05,
        "conv2_b": jax.random.normal(k4, (64,), jnp.float32) * 0.05,
        "fc_w": jax.random.normal(k5, (feat, embedded_size), jnp.float32) * 0.05,
        "fc_b": jax.random.normal(k6, (embedded_size,), jnp.float32) * 0.05,
    }


# ----------------------------------------------------------------------------
# Pure-JAX reference (mirrors the PyTorch forward) for correctness checking.
# ----------------------------------------------------------------------------
def reference_forward(state, params):
    dn = ("NCHW", "OIHW", "NCHW")
    y = jax.lax.conv_general_dilated(state, params["conv1_w"], (2, 2), "VALID",
                                     dimension_numbers=dn)
    y = jnp.maximum(y + params["conv1_b"][None, :, None, None], 0.0)
    y = jax.lax.conv_general_dilated(y, params["conv2_w"], (2, 2), "VALID",
                                     dimension_numbers=dn)
    y = jnp.maximum(y + params["conv2_b"][None, :, None, None], 0.0)
    y = y.reshape(1, -1)
    return y @ params["fc_w"] + params["fc_b"]


if __name__ == "__main__":
    input_shape = (4, 16, 16)   # (C, H, W) -> conv1: 7x7, conv2: 3x3, feat=576
    embedded_size = 128         # small synthetic embedded size

    key = jax.random.PRNGKey(0)
    pkey, xkey = jax.random.split(key)
    params = init_params(pkey, input_shape, embedded_size)
    kparams = prepare_kernel_params(params, input_shape, embedded_size)
    state = jax.random.normal(xkey, (1, *input_shape), jnp.float32)

    out = jax.block_until_ready(embedding_net_forward(state, kparams))
    assert out.shape == (1, embedded_size), out.shape

    ref = jax.block_until_ready(reference_forward(state, params))
    max_err = float(jnp.max(jnp.abs(out - ref)))
    # Both paths use the MXU's default f32 matmul precision but decompose the
    # convs differently, so agreement is ~1e-3; 1e-2 gives margin without
    # masking real regressions (tightened from 5e-2).
    assert max_err < 1e-2, f"mismatch vs reference: {max_err}"

    print("KERNEL_OK")
</pallas_src>

<mosaic_0001>
module attributes {stable_mosaic.version = 11 : i64} {
  func.func @_embedding_net_kernel(%arg0: memref<256x128xf32, #tpu.memory_space<vmem>>, %arg1: memref<9x56x256xf32, #tpu.memory_space<vmem>>, %arg2: memref<9x128x32xf32, #tpu.memory_space<vmem>>, %arg3: memref<9x16x56xf32, #tpu.memory_space<vmem>>, %arg4: memref<9x32x64xf32, #tpu.memory_space<vmem>>, %arg5: memref<1x64xf32, #tpu.memory_space<vmem>>, %arg6: memref<9x64x128xf32, #tpu.memory_space<vmem>>, %arg7: memref<1x128xf32, #tpu.memory_space<vmem>>, %arg8: memref<1x128xf32, #tpu.memory_space<vmem>>, %arg9: memref<16x64xf32, #tpu.memory_space<vmem>>) attributes {dimension_semantics = [], scalar_prefetch = 0 : i64, scratch_operands = 1 : i64, tpu.core_type = #tpu.core_type<tc>} {
    %c0 = arith.constant 0 : index
    %c0_0 = arith.constant 0 : index
    %0 = vector.load %arg0[%c0, %c0_0] : memref<256x128xf32, #tpu.memory_space<vmem>>, vector<256x128xf32>
    %c0_1 = arith.constant 0 : index
    %c0_2 = arith.constant 0 : index
    %c0_3 = arith.constant 0 : index
    %1 = vector.load %arg1[%c0_1, %c0_2, %c0_3] : memref<9x56x256xf32, #tpu.memory_space<vmem>>, vector<1x56x256xf32>
    %2 = vector.shape_cast %1 : vector<1x56x256xf32> to vector<56x256xf32>
    %cst = arith.constant dense<0.000000e+00> : vector<56x128xf32>
    %3 = tpu.matmul %2, %0, %cst {dimension_numbers = #tpu.dot_dimension_numbers<[1], [0], [0], [1], [0, 0, 1, 1], [], []>} : vector<56x256xf32>, vector<256x128xf32>, vector<56x128xf32> -> vector<56x128xf32>
    %c0_4 = arith.constant 0 : index
    %c0_5 = arith.constant 0 : index
    %c0_6 = arith.constant 0 : index
    %4 = vector.load %arg2[%c0_4, %c0_5, %c0_6] : memref<9x128x32xf32, #tpu.memory_space<vmem>>, vector<1x128x32xf32>
    %5 = vector.shape_cast %4 : vector<1x128x32xf32> to vector<128x32xf32>
    %cst_7 = arith.constant dense<0.000000e+00> : vector<56x32xf32>
    %6 = tpu.matmul %3, %5, %cst_7 {dimension_numbers = #tpu.dot_dimension_numbers<[1], [0], [0], [1], [0, 0, 1, 1], [], []>} : vector<56x128xf32>, vector<128x32xf32>, vector<56x32xf32> -> vector<56x32xf32>
    %c1 = arith.constant 1 : index
    %c0_8 = arith.constant 0 : index
    %c0_9 = arith.constant 0 : index
    %7 = vector.load %arg1[%c1, %c0_8, %c0_9] : memref<9x56x256xf32, #tpu.memory_space<vmem>>, vector<1x56x256xf32>
    %8 = vector.shape_cast %7 : vector<1x56x256xf32> to vector<56x256xf32>
    %cst_10 = arith.constant dense<0.000000e+00> : vector<56x128xf32>
    %9 = tpu.matmul %8, %0, %cst_10 {dimension_numbers = #tpu.dot_dimension_numbers<[1], [0], [0], [1], [0, 0, 1, 1], [], []>} : vector<56x256xf32>, vector<256x128xf32>, vector<56x128xf32> -> vector<56x128xf32>
    %c1_11 = arith.constant 1 : index
    %c0_12 = arith.constant 0 : index
    %c0_13 = arith.constant 0 : index
    %10 = vector.load %arg2[%c1_11, %c0_12, %c0_13] : memref<9x128x32xf32, #tpu.memory_space<vmem>>, vector<1x128x32xf32>
    %11 = vector.shape_cast %10 : vector<1x128x32xf32> to vector<128x32xf32>
    %cst_14 = arith.constant dense<0.000000e+00> : vector<56x32xf32>
    %12 = tpu.matmul %9, %11, %cst_14 {dimension_numbers = #tpu.dot_dimension_numbers<[1], [0], [0], [1], [0, 0, 1, 1], [], []>} : vector<56x128xf32>, vector<128x32xf32>, vector<56x32xf32> -> vector<56x32xf32>
    %13 = arith.addf %6, %12 : vector<56x32xf32>
    %c2 = arith.constant 2 : index
    %c0_15 = arith.constant 0 : index
    %c0_16 = arith.constant 0 : index
    %14 = vector.load %arg1[%c2, %c0_15, %c0_16] : memref<9x56x256xf32, #tpu.memory_space<vmem>>, vector<1x56x256xf32>
    %15 = vector.shape_cast %14 : vector<1x56x256xf32> to vector<56x256xf32>
    %cst_17 = arith.constant dense<0.000000e+00> : vector<56x128xf32>
    %16 = tpu.matmul %15, %0, %cst_17 {dimension_numbers = #tpu.dot_dimension_numbers<[1], [0], [0], [1], [0, 0, 1, 1], [], []>} : vector<56x256xf32>, vector<256x128xf32>, vector<56x128xf32> -> vector<56x128xf32>
    %c2_18 = arith.constant 2 : index
    %c0_19 = arith.constant 0 : index
    %c0_20 = arith.constant 0 : index
    %17 = vector.load %arg2[%c2_18, %c0_19, %c0_20] : memref<9x128x32xf32, #tpu.memory_space<vmem>>, vector<1x128x32xf32>
    %18 = vector.shape_cast %17 : vector<1x128x32xf32> to vector<128x32xf32>
    %cst_21 = arith.constant dense<0.000000e+00> : vector<56x32xf32>
    %19 = tpu.matmul %16, %18, %cst_21 {dimension_numbers = #tpu.dot_dimension_numbers<[1], [0], [0], [1], [0, 0, 1, 1], [], []>} : vector<56x128xf32>, vector<128x32xf32>, vector<56x32xf32> -> vector<56x32xf32>
    %20 = arith.addf %13, %19 : vector<56x32xf32>
    %c3 = arith.constant 3 : index
    %c0_22 = arith.constant 0 : index
    %c0_23 = arith.constant 0 : index
    %21 = vector.load %arg1[%c3, %c0_22, %c0_23] : memref<9x56x256xf32, #tpu.memory_space<vmem>>, vector<1x56x256xf32>
    %22 = vector.shape_cast %21 : vector<1x56x256xf32> to vector<56x256xf32>
    %cst_24 = arith.constant dense<0.000000e+00> : vector<56x128xf32>
    %23 = tpu.matmul %22, %0, %cst_24 {dimension_numbers = #tpu.dot_dimension_numbers<[1], [0], [0], [1], [0, 0, 1, 1], [], []>} : vector<56x256xf32>, vector<256x128xf32>, vector<56x128xf32> -> vector<56x128xf32>
    %c3_25 = arith.constant 3 : index
    %c0_26 = arith.constant 0 : index
    %c0_27 = arith.constant 0 : index
    %24 = vector.load %arg2[%c3_25, %c0_26, %c0_27] : memref<9x128x32xf32, #tpu.memory_space<vmem>>, vector<1x128x32xf32>
    %25 = vector.shape_cast %24 : vector<1x128x32xf32> to vector<128x32xf32>
    %cst_28 = arith.constant dense<0.000000e+00> : vector<56x32xf32>
    %26 = tpu.matmul %23, %25, %cst_28 {dimension_numbers = #tpu.dot_dimension_numbers<[1], [0], [0], [1], [0, 0, 1, 1], [], []>} : vector<56x128xf32>, vector<128x32xf32>, vector<56x32xf32> -> vector<56x32xf32>
    %27 = arith.addf %20, %26 : vector<56x32xf32>
    %c4 = arith.constant 4 : index
    %c0_29 = arith.constant 0 : index
    %c0_30 = arith.constant 0 : index
    %28 = vector.load %arg1[%c4, %c0_29, %c0_30] : memref<9x56x256xf32, #tpu.memory_space<vmem>>, vector<1x56x256xf32>
    %29 = vector.shape_cast %28 : vector<1x56x256xf32> to vector<56x256xf32>
    %cst_31 = arith.constant dense<0.000000e+00> : vector<56x128xf32>
    %30 = tpu.matmul %29, %0, %cst_31 {dimension_numbers = #tpu.dot_dimension_numbers<[1], [0], [0], [1], [0, 0, 1, 1], [], []>} : vector<56x256xf32>, vector<256x128xf32>, vector<56x128xf32> -> vector<56x128xf32>
    %c4_32 = arith.constant 4 : index
    %c0_33 = arith.constant 0 : index
    %c0_34 = arith.constant 0 : index
    %31 = vector.load %arg2[%c4_32, %c0_33, %c0_34] : memref<9x128x32xf32, #tpu.memory_space<vmem>>, vector<1x128x32xf32>
    %32 = vector.shape_cast %31 : vector<1x128x32xf32> to vector<128x32xf32>
    %cst_35 = arith.constant dense<0.000000e+00> : vector<56x32xf32>
    %33 = tpu.matmul %30, %32, %cst_35 {dimension_numbers = #tpu.dot_dimension_numbers<[1], [0], [0], [1], [0, 0, 1, 1], [], []>} : vector<56x128xf32>, vector<128x32xf32>, vector<56x32xf32> -> vector<56x32xf32>
    %34 = arith.addf %27, %33 : vector<56x32xf32>
    %c5 = arith.constant 5 : index
    %c0_36 = arith.constant 0 : index
    %c0_37 = arith.constant 0 : index
    %35 = vector.load %arg1[%c5, %c0_36, %c0_37] : memref<9x56x256xf32, #tpu.memory_space<vmem>>, vector<1x56x256xf32>
    %36 = vector.shape_cast %35 : vector<1x56x256xf32> to vector<56x256xf32>
    %cst_38 = arith.constant dense<0.000000e+00> : vector<56x128xf32>
    %37 = tpu.matmul %36, %0, %cst_38 {dimension_numbers = #tpu.dot_dimension_numbers<[1], [0], [0], [1], [0, 0, 1, 1], [], []>} : vector<56x256xf32>, vector<256x128xf32>, vector<56x128xf32> -> vector<56x128xf32>
    %c5_39 = arith.constant 5 : index
    %c0_40 = arith.constant 0 : index
    %c0_41 = arith.constant 0 : index
    %38 = vector.load %arg2[%c5_39, %c0_40, %c0_41] : memref<9x128x32xf32, #tpu.memory_space<vmem>>, vector<1x128x32xf32>
    %39 = vector.shape_cast %38 : vector<1x128x32xf32> to vector<128x32xf32>
    %cst_42 = arith.constant dense<0.000000e+00> : vector<56x32xf32>
    %40 = tpu.matmul %37, %39, %cst_42 {dimension_numbers = #tpu.dot_dimension_numbers<[1], [0], [0], [1], [0, 0, 1, 1], [], []>} : vector<56x128xf32>, vector<128x32xf32>, vector<56x32xf32> -> vector<56x32xf32>
    %41 = arith.addf %34, %40 : vector<56x32xf32>
    %c6 = arith.constant 6 : index
    %c0_43 = arith.constant 0 : index
    %c0_44 = arith.constant 0 : index
    %42 = vector.load %arg1[%c6, %c0_43, %c0_44] : memref<9x56x256xf32, #tpu.memory_space<vmem>>, vector<1x56x256xf32>
    %43 = vector.shape_cast %42 : vector<1x56x256xf32> to vector<56x256xf32>
    %cst_45 = arith.constant dense<0.000000e+00> : vector<56x128xf32>
    %44 = tpu.matmul %43, %0, %cst_45 {dimension_numbers = #tpu.dot_dimension_numbers<[1], [0], [0], [1], [0, 0, 1, 1], [], []>} : vector<56x256xf32>, vector<256x128xf32>, vector<56x128xf32> -> vector<56x128xf32>
    %c6_46 = arith.constant 6 : index
    %c0_47 = arith.constant 0 : index
    %c0_48 = arith.constant 0 : index
    %45 = vector.load %arg2[%c6_46, %c0_47, %c0_48] : memref<9x128x32xf32, #tpu.memory_space<vmem>>, vector<1x128x32xf32>
    %46 = vector.shape_cast %45 : vector<1x128x32xf32> to vector<128x32xf32>
    %cst_49 = arith.constant dense<0.000000e+00> : vector<56x32xf32>
    %47 = tpu.matmul %44, %46, %cst_49 {dimension_numbers = #tpu.dot_dimension_numbers<[1], [0], [0], [1], [0, 0, 1, 1], [], []>} : vector<56x128xf32>, vector<128x32xf32>, vector<56x32xf32> -> vector<56x32xf32>
    %48 = arith.addf %41, %47 : vector<56x32xf32>
    %c7 = arith.constant 7 : index
    %c0_50 = arith.constant 0 : index
    %c0_51 = arith.constant 0 : index
    %49 = vector.load %arg1[%c7, %c0_50, %c0_51] : memref<9x56x256xf32, #tpu.memory_space<vmem>>, vector<1x56x256xf32>
    %50 = vector.shape_cast %49 : vector<1x56x256xf32> to vector<56x256xf32>
    %cst_52 = arith.constant dense<0.000000e+00> : vector<56x128xf32>
    %51 = tpu.matmul %50, %0, %cst_52 {dimension_numbers = #tpu.dot_dimension_numbers<[1], [0], [0], [1], [0, 0, 1, 1], [], []>} : vector<56x256xf32>, vector<256x128xf32>, vector<56x128xf32> -> vector<56x128xf32>
    %c7_53 = arith.constant 7 : index
    %c0_54 = arith.constant 0 : index
    %c0_55 = arith.constant 0 : index
    %52 = vector.load %arg2[%c7_53, %c0_54, %c0_55] : memref<9x128x32xf32, #tpu.memory_space<vmem>>, vector<1x128x32xf32>
    %53 = vector.shape_cast %52 : vector<1x128x32xf32> to vector<128x32xf32>
    %cst_56 = arith.constant dense<0.000000e+00> : vector<56x32xf32>
    %54 = tpu.matmul %51, %53, %cst_56 {dimension_numbers = #tpu.dot_dimension_numbers<[1], [0], [0], [1], [0, 0, 1, 1], [], []>} : vector<56x128xf32>, vector<128x32xf32>, vector<56x32xf32> -> vector<56x32xf32>
    %55 = arith.addf %48, %54 : vector<56x32xf32>
    %c8 = arith.constant 8 : index
    %c0_57 = arith.constant 0 : index
    %c0_58 = arith.constant 0 : index
    %56 = vector.load %arg1[%c8, %c0_57, %c0_58] : memref<9x56x256xf32, #tpu.memory_space<vmem>>, vector<1x56x256xf32>
    %57 = vector.shape_cast %56 : vector<1x56x256xf32> to vector<56x256xf32>
    %cst_59 = arith.constant dense<0.000000e+00> : vector<56x128xf32>
    %58 = tpu.matmul %57, %0, %cst_59 {dimension_numbers = #tpu.dot_dimension_numbers<[1], [0], [0], [1], [0, 0, 1, 1], [], []>} : vector<56x256xf32>, vector<256x128xf32>, vector<56x128xf32> -> vector<56x128xf32>
    %c8_60 = arith.constant 8 : index
    %c0_61 = arith.constant 0 : index
    %c0_62 = arith.constant 0 : index
    %59 = vector.load %arg2[%c8_60, %c0_61, %c0_62] : memref<9x128x32xf32, #tpu.memory_space<vmem>>, vector<1x128x32xf32>
    %60 = vector.shape_cast %59 : vector<1x128x32xf32> to vector<128x32xf32>
    %cst_63 = arith.constant dense<0.000000e+00> : vector<56x32xf32>
    %61 = tpu.matmul %58, %60, %cst_63 {dimension_numbers = #tpu.dot_dimension_numbers<[1], [0], [0], [1], [0, 0, 1, 1], [], []>} : vector<56x128xf32>, vector<128x32xf32>, vector<56x32xf32> -> vector<56x32xf32>
    %62 = arith.addf %55, %61 : vector<56x32xf32>
    %cst_64 = arith.constant 0.000000e+00 : f32
    %63 = vector.broadcast %cst_64 : f32 to vector<56x32xf32>
    %64 = arith.maximumf %62, %63 : vector<56x32xf32>
    %c0_65 = arith.constant 0 : index
    %c0_66 = arith.constant 0 : index
    %c0_67 = arith.constant 0 : index
    %65 = vector.load %arg3[%c0_65, %c0_66, %c0_67] : memref<9x16x56xf32, #tpu.memory_space<vmem>>, vector<1x16x56xf32>
    %66 = vector.shape_cast %65 : vector<1x16x56xf32> to vector<16x56xf32>
    %cst_68 = arith.constant dense<0.000000e+00> : vector<16x32xf32>
    %67 = tpu.matmul %66, %64, %cst_68 {dimension_numbers = #tpu.dot_dimension_numbers<[1], [0], [0], [1], [0, 0, 1, 1], [], []>} : vector<16x56xf32>, vector<56x32xf32>, vector<16x32xf32> -> vector<16x32xf32>
    %c0_69 = arith.constant 0 : index
    %c0_70 = arith.constant 0 : index
    %c0_71 = arith.constant 0 : index
    %68 = vector.load %arg4[%c0_69, %c0_70, %c0_71] : memref<9x32x64xf32, #tpu.memory_space<vmem>>, vector<1x32x64xf32>
    %69 = vector.shape_cast %68 : vector<1x32x64xf32> to vector<32x64xf32>
    %cst_72 = arith.constant dense<0.000000e+00> : vector<16x64xf32>
    %70 = tpu.matmul %67, %69, %cst_72 {dimension_numbers = #tpu.dot_dimension_numbers<[1], [0], [0], [1], [0, 0, 1, 1], [], []>} : vector<16x32xf32>, vector<32x64xf32>, vector<16x64xf32> -> vector<16x64xf32>
    %c1_73 = arith.constant 1 : index
    %c0_74 = arith.constant 0 : index
    %c0_75 = arith.constant 0 : index
    %71 = vector.load %arg3[%c1_73, %c0_74, %c0_75] : memref<9x16x56xf32, #tpu.memory_space<vmem>>, vector<1x16x56xf32>
    %72 = vector.shape_cast %71 : vector<1x16x56xf32> to vector<16x56xf32>
    %cst_76 = arith.constant dense<0.000000e+00> : vector<16x32xf32>
    %73 = tpu.matmul %72, %64, %cst_76 {dimension_numbers = #tpu.dot_dimension_numbers<[1], [0], [0], [1], [0, 0, 1, 1], [], []>} : vector<16x56xf32>, vector<56x32xf32>, vector<16x32xf32> -> vector<16x32xf32>
    %c1_77 = arith.constant 1 : index
    %c0_78 = arith.constant 0 : index
    %c0_79 = arith.constant 0 : index
    %74 = vector.load %arg4[%c1_77, %c0_78, %c0_79] : memref<9x32x64xf32, #tpu.memory_space<vmem>>, vector<1x32x64xf32>
    %75 = vector.shape_cast %74 : vector<1x32x64xf32> to vector<32x64xf32>
    %cst_80 = arith.constant dense<0.000000e+00> : vector<16x64xf32>
    %76 = tpu.matmul %73, %75, %cst_80 {dimension_numbers = #tpu.dot_dimension_numbers<[1], [0], [0], [1], [0, 0, 1, 1], [], []>} : vector<16x32xf32>, vector<32x64xf32>, vector<16x64xf32> -> vector<16x64xf32>
    %77 = arith.addf %70, %76 : vector<16x64xf32>
    %c2_81 = arith.constant 2 : index
    %c0_82 = arith.constant 0 : index
    %c0_83 = arith.constant 0 : index
    %78 = vector.load %arg3[%c2_81, %c0_82, %c0_83] : memref<9x16x56xf32, #tpu.memory_space<vmem>>, vector<1x16x56xf32>
    %79 = vector.shape_cast %78 : vector<1x16x56xf32> to vector<16x56xf32>
    %cst_84 = arith.constant dense<0.000000e+00> : vector<16x32xf32>
    %80 = tpu.matmul %79, %64, %cst_84 {dimension_numbers = #tpu.dot_dimension_numbers<[1], [0], [0], [1], [0, 0, 1, 1], [], []>} : vector<16x56xf32>, vector<56x32xf32>, vector<16x32xf32> -> vector<16x32xf32>
    %c2_85 = arith.constant 2 : index
    %c0_86 = arith.constant 0 : index
    %c0_87 = arith.constant 0 : index
    %81 = vector.load %arg4[%c2_85, %c0_86, %c0_87] : memref<9x32x64xf32, #tpu.memory_space<vmem>>, vector<1x32x64xf32>
    %82 = vector.shape_cast %81 : vector<1x32x64xf32> to vector<32x64xf32>
    %cst_88 = arith.constant dense<0.000000e+00> : vector<16x64xf32>
    %83 = tpu.matmul %80, %82, %cst_88 {dimension_numbers = #tpu.dot_dimension_numbers<[1], [0], [0], [1], [0, 0, 1, 1], [], []>} : vector<16x32xf32>, vector<32x64xf32>, vector<16x64xf32> -> vector<16x64xf32>
    %84 = arith.addf %77, %83 : vector<16x64xf32>
    %c3_89 = arith.constant 3 : index
    %c0_90 = arith.constant 0 : index
    %c0_91 = arith.constant 0 : index
    %85 = vector.load %arg3[%c3_89, %c0_90, %c0_91] : memref<9x16x56xf32, #tpu.memory_space<vmem>>, vector<1x16x56xf32>
    %86 = vector.shape_cast %85 : vector<1x16x56xf32> to vector<16x56xf32>
    %cst_92 = arith.constant dense<0.000000e+00> : vector<16x32xf32>
    %87 = tpu.matmul %86, %64, %cst_92 {dimension_numbers = #tpu.dot_dimension_numbers<[1], [0], [0], [1], [0, 0, 1, 1], [], []>} : vector<16x56xf32>, vector<56x32xf32>, vector<16x32xf32> -> vector<16x32xf32>
    %c3_93 = arith.constant 3 : index
    %c0_94 = arith.constant 0 : index
    %c0_95 = arith.constant 0 : index
    %88 = vector.load %arg4[%c3_93, %c0_94, %c0_95] : memref<9x32x64xf32, #tpu.memory_space<vmem>>, vector<1x32x64xf32>
    %89 = vector.shape_cast %88 : vector<1x32x64xf32> to vector<32x64xf32>
    %cst_96 = arith.constant dense<0.000000e+00> : vector<16x64xf32>
    %90 = tpu.matmul %87, %89, %cst_96 {dimension_numbers = #tpu.dot_dimension_numbers<[1], [0], [0], [1], [0, 0, 1, 1], [], []>} : vector<16x32xf32>, vector<32x64xf32>, vector<16x64xf32> -> vector<16x64xf32>
    %91 = arith.addf %84, %90 : vector<16x64xf32>
    %c4_97 = arith.constant 4 : index
    %c0_98 = arith.constant 0 : index
    %c0_99 = arith.constant 0 : index
    %92 = vector.load %arg3[%c4_97, %c0_98, %c0_99] : memref<9x16x56xf32, #tpu.memory_space<vmem>>, vector<1x16x56xf32>
    %93 = vector.shape_cast %92 : vector<1x16x56xf32> to vector<16x56xf32>
    %cst_100 = arith.constant dense<0.000000e+00> : vector<16x32xf32>
    %94 = tpu.matmul %93, %64, %cst_100 {dimension_numbers = #tpu.dot_dimension_numbers<[1], [0], [0], [1], [0, 0, 1, 1], [], []>} : vector<16x56xf32>, vector<56x32xf32>, vector<16x32xf32> -> vector<16x32xf32>
    %c4_101 = arith.constant 4 : index
    %c0_102 = arith.constant 0 : index
    %c0_103 = arith.constant 0 : index
    %95 = vector.load %arg4[%c4_101, %c0_102, %c0_103] : memref<9x32x64xf32, #tpu.memory_space<vmem>>, vector<1x32x64xf32>
    %96 = vector.shape_cast %95 : vector<1x32x64xf32> to vector<32x64xf32>
    %cst_104 = arith.constant dense<0.000000e+00> : vector<16x64xf32>
    %97 = tpu.matmul %94, %96, %cst_104 {dimension_numbers = #tpu.dot_dimension_numbers<[1], [0], [0], [1], [0, 0, 1, 1], [], []>} : vector<16x32xf32>, vector<32x64xf32>, vector<16x64xf32> -> vector<16x64xf32>
    %98 = arith.addf %91, %97 : vector<16x64xf32>
    %c5_105 = arith.constant 5 : index
    %c0_106 = arith.constant 0 : index
    %c0_107 = arith.constant 0 : index
    %99 = vector.load %arg3[%c5_105, %c0_106, %c0_107] : memref<9x16x56xf32, #tpu.memory_space<vmem>>, vector<1x16x56xf32>
    %100 = vector.shape_cast %99 : vector<1x16x56xf32> to vector<16x56xf32>
    %cst_108 = arith.constant dense<0.000000e+00> : vector<16x32xf32>
    %101 = tpu.matmul %100, %64, %cst_108 {dimension_numbers = #tpu.dot_dimension_numbers<[1], [0], [0], [1], [0, 0, 1, 1], [], []>} : vector<16x56xf32>, vector<56x32xf32>, vector<16x32xf32> -> vector<16x32xf32>
    %c5_109 = arith.constant 5 : index
    %c0_110 = arith.constant 0 : index
    %c0_111 = arith.constant 0 : index
    %102 = vector.load %arg4[%c5_109, %c0_110, %c0_111] : memref<9x32x64xf32, #tpu.memory_space<vmem>>, vector<1x32x64xf32>
    %103 = vector.shape_cast %102 : vector<1x32x64xf32> to vector<32x64xf32>
    %cst_112 = arith.constant dense<0.000000e+00> : vector<16x64xf32>
    %104 = tpu.matmul %101, %103, %cst_112 {dimension_numbers = #tpu.dot_dimension_numbers<[1], [0], [0], [1], [0, 0, 1, 1], [], []>} : vector<16x32xf32>, vector<32x64xf32>, vector<16x64xf32> -> vector<16x64xf32>
    %105 = arith.addf %98, %104 : vector<16x64xf32>
    %c6_113 = arith.constant 6 : index
    %c0_114 = arith.constant 0 : index
    %c0_115 = arith.constant 0 : index
    %106 = vector.load %arg3[%c6_113, %c0_114, %c0_115] : memref<9x16x56xf32, #tpu.memory_space<vmem>>, vector<1x16x56xf32>
    %107 = vector.shape_cast %106 : vector<1x16x56xf32> to vector<16x56xf32>
    %cst_116 = arith.constant dense<0.000000e+00> : vector<16x32xf32>
    %108 = tpu.matmul %107, %64, %cst_116 {dimension_numbers = #tpu.dot_dimension_numbers<[1], [0], [0], [1], [0, 0, 1, 1], [], []>} : vector<16x56xf32>, vector<56x32xf32>, vector<16x32xf32> -> vector<16x32xf32>
    %c6_117 = arith.constant 6 : index
    %c0_118 = arith.constant 0 : index
    %c0_119 = arith.constant 0 : index
    %109 = vector.load %arg4[%c6_117, %c0_118, %c0_119] : memref<9x32x64xf32, #tpu.memory_space<vmem>>, vector<1x32x64xf32>
    %110 = vector.shape_cast %109 : vector<1x32x64xf32> to vector<32x64xf32>
    %cst_120 = arith.constant dense<0.000000e+00> : vector<16x64xf32>
    %111 = tpu.matmul %108, %110, %cst_120 {dimension_numbers = #tpu.dot_dimension_numbers<[1], [0], [0], [1], [0, 0, 1, 1], [], []>} : vector<16x32xf32>, vector<32x64xf32>, vector<16x64xf32> -> vector<16x64xf32>
    %112 = arith.addf %105, %111 : vector<16x64xf32>
    %c7_121 = arith.constant 7 : index
    %c0_122 = arith.constant 0 : index
    %c0_123 = arith.constant 0 : index
    %113 = vector.load %arg3[%c7_121, %c0_122, %c0_123] : memref<9x16x56xf32, #tpu.memory_space<vmem>>, vector<1x16x56xf32>
    %114 = vector.shape_cast %113 : vector<1x16x56xf32> to vector<16x56xf32>
    %cst_124 = arith.constant dense<0.000000e+00> : vector<16x32xf32>
    %115 = tpu.matmul %114, %64, %cst_124 {dimension_numbers = #tpu.dot_dimension_numbers<[1], [0], [0], [1], [0, 0, 1, 1], [], []>} : vector<16x56xf32>, vector<56x32xf32>, vector<16x32xf32> -> vector<16x32xf32>
    %c7_125 = arith.constant 7 : index
    %c0_126 = arith.constant 0 : index
    %c0_127 = arith.constant 0 : index
    %116 = vector.load %arg4[%c7_125, %c0_126, %c0_127] : memref<9x32x64xf32, #tpu.memory_space<vmem>>, vector<1x32x64xf32>
    %117 = vector.shape_cast %116 : vector<1x32x64xf32> to vector<32x64xf32>
    %cst_128 = arith.constant dense<0.000000e+00> : vector<16x64xf32>
    %118 = tpu.matmul %115, %117, %cst_128 {dimension_numbers = #tpu.dot_dimension_numbers<[1], [0], [0], [1], [0, 0, 1, 1], [], []>} : vector<16x32xf32>, vector<32x64xf32>, vector<16x64xf32> -> vector<16x64xf32>
    %119 = arith.addf %112, %118 : vector<16x64xf32>
    %c8_129 = arith.constant 8 : index
    %c0_130 = arith.constant 0 : index
    %c0_131 = arith.constant 0 : index
    %120 = vector.load %arg3[%c8_129, %c0_130, %c0_131] : memref<9x16x56xf32, #tpu.memory_space<vmem>>, vector<1x16x56xf32>
    %121 = vector.shape_cast %120 : vector<1x16x56xf32> to vector<16x56xf32>
    %cst_132 = arith.constant dense<0.000000e+00> : vector<16x32xf32>
    %122 = tpu.matmul %121, %64, %cst_132 {dimension_numbers = #tpu.dot_dimension_numbers<[1], [0], [0], [1], [0, 0, 1, 1], [], []>} : vector<16x56xf32>, vector<56x32xf32>, vector<16x32xf32> -> vector<16x32xf32>
    %c8_133 = arith.constant 8 : index
    %c0_134 = arith.constant 0 : index
    %c0_135 = arith.constant 0 : index
    %123 = vector.load %arg4[%c8_133, %c0_134, %c0_135] : memref<9x32x64xf32, #tpu.memory_space<vmem>>, vector<1x32x64xf32>
    %124 = vector.shape_cast %123 : vector<1x32x64xf32> to vector<32x64xf32>
    %cst_136 = arith.constant dense<0.000000e+00> : vector<16x64xf32>
    %125 = tpu.matmul %122, %124, %cst_136 {dimension_numbers = #tpu.dot_dimension_numbers<[1], [0], [0], [1], [0, 0, 1, 1], [], []>} : vector<16x32xf32>, vector<32x64xf32>, vector<16x64xf32> -> vector<16x64xf32>
    %126 = arith.addf %119, %125 : vector<16x64xf32>
    %c0_137 = arith.constant 0 : index
    %c0_138 = arith.constant 0 : index
    %127 = vector.load %arg5[%c0_137, %c0_138] : memref<1x64xf32, #tpu.memory_space<vmem>>, vector<1x64xf32>
    %128 = vector.broadcast %127 : vector<1x64xf32> to vector<16x64xf32>
    %129 = arith.addf %126, %128 : vector<16x64xf32>
    %cst_139 = arith.constant 0.000000e+00 : f32
    %130 = vector.broadcast %cst_139 : f32 to vector<16x64xf32>
    %131 = arith.maximumf %129, %130 : vector<16x64xf32>
    %c0_140 = arith.constant 0 : index
    %c0_141 = arith.constant 0 : index
    %132 = vector.load %arg9[%c0_140, %c0_141] : memref<16x64xf32, #tpu.memory_space<vmem>>, vector<16x64xf32>
    tpu.vector_store %arg9[%c0_140, %c0_141], %131 {strides = array<i32>} : memref<16x64xf32, #tpu.memory_space<vmem>>, vector<16x64xf32>,
    %c0_142 = arith.constant 0 : index
    %c0_143 = arith.constant 0 : index
    %133 = vector.load %arg7[%c0_142, %c0_143] : memref<1x128xf32, #tpu.memory_space<vmem>>, vector<1x128xf32>
    %c0_144 = arith.constant 0 : index
    %c0_145 = arith.constant 0 : index
    %134 = vector.load %arg9[%c0_144, %c0_145] : memref<16x64xf32, #tpu.memory_space<vmem>>, vector<1x64xf32>
    %c0_146 = arith.constant 0 : index
    %c0_147 = arith.constant 0 : index
    %c0_148 = arith.constant 0 : index
    %135 = vector.load %arg6[%c0_146, %c0_147, %c0_148] : memref<9x64x128xf32, #tpu.memory_space<vmem>>, vector<1x64x128xf32>
    %136 = vector.shape_cast %135 : vector<1x64x128xf32> to vector<64x128xf32>
    %cst_149 = arith.constant dense<0.000000e+00> : vector<1x128xf32>
    %137 = tpu.matmul %134, %136, %cst_149 {dimension_numbers = #tpu.dot_dimension_numbers<[1], [0], [0], [1], [0, 0, 1, 1], [], []>} : vector<1x64xf32>, vector<64x128xf32>, vector<1x128xf32> -> vector<1x128xf32>
    %138 = arith.addf %133, %137 : vector<1x128xf32>
    %c1_150 = arith.constant 1 : index
    %c0_151 = arith.constant 0 : index
    %139 = vector.load %arg9[%c1_150, %c0_151] : memref<16x64xf32, #tpu.memory_space<vmem>>, vector<1x64xf32>
    %c1_152 = arith.constant 1 : index
    %c0_153 = arith.constant 0 : index
    %c0_154 = arith.constant 0 : index
    %140 = vector.load %arg6[%c1_152, %c0_153, %c0_154] : memref<9x64x128xf32, #tpu.memory_space<vmem>>, vector<1x64x128xf32>
    %141 = vector.shape_cast %140 : vector<1x64x128xf32> to vector<64x128xf32>
    %cst_155 = arith.constant dense<0.000000e+00> : vector<1x128xf32>
    %142 = tpu.matmul %139, %141, %cst_155 {dimension_numbers = #tpu.dot_dimension_numbers<[1], [0], [0], [1], [0, 0, 1, 1], [], []>} : vector<1x64xf32>, vector<64x128xf32>, vector<1x128xf32> -> vector<1x128xf32>
    %143 = arith.addf %138, %142 : vector<1x128xf32>
    %c2_156 = arith.constant 2 : index
    %c0_157 = arith.constant 0 : index
    %144 = vector.load %arg9[%c2_156, %c0_157] : memref<16x64xf32, #tpu.memory_space<vmem>>, vector<1x64xf32>
    %c2_158 = arith.constant 2 : index
    %c0_159 = arith.constant 0 : index
    %c0_160 = arith.constant 0 : index
    %145 = vector.load %arg6[%c2_158, %c0_159, %c0_160] : memref<9x64x128xf32, #tpu.memory_space<vmem>>, vector<1x64x128xf32>
    %146 = vector.shape_cast %145 : vector<1x64x128xf32> to vector<64x128xf32>
    %cst_161 = arith.constant dense<0.000000e+00> : vector<1x128xf32>
    %147 = tpu.matmul %144, %146, %cst_161 {dimension_numbers = #tpu.dot_dimension_numbers<[1], [0], [0], [1], [0, 0, 1, 1], [], []>} : vector<1x64xf32>, vector<64x128xf32>, vector<1x128xf32> -> vector<1x128xf32>
    %148 = arith.addf %143, %147 : vector<1x128xf32>
    %c3_162 = arith.constant 3 : index
    %c0_163 = arith.constant 0 : index
    %149 = vector.load %arg9[%c3_162, %c0_163] : memref<16x64xf32, #tpu.memory_space<vmem>>, vector<1x64xf32>
    %c3_164 = arith.constant 3 : index
    %c0_165 = arith.constant 0 : index
    %c0_166 = arith.constant 0 : index
    %150 = vector.load %arg6[%c3_164, %c0_165, %c0_166] : memref<9x64x128xf32, #tpu.memory_space<vmem>>, vector<1x64x128xf32>
    %151 = vector.shape_cast %150 : vector<1x64x128xf32> to vector<64x128xf32>
    %cst_167 = arith.constant dense<0.000000e+00> : vector<1x128xf32>
    %152 = tpu.matmul %149, %151, %cst_167 {dimension_numbers = #tpu.dot_dimension_numbers<[1], [0], [0], [1], [0, 0, 1, 1], [], []>} : vector<1x64xf32>, vector<64x128xf32>, vector<1x128xf32> -> vector<1x128xf32>
    %153 = arith.addf %148, %152 : vector<1x128xf32>
    %c4_168 = arith.constant 4 : index
    %c0_169 = arith.constant 0 : index
    %154 = vector.load %arg9[%c4_168, %c0_169] : memref<16x64xf32, #tpu.memory_space<vmem>>, vector<1x64xf32>
    %c4_170 = arith.constant 4 : index
    %c0_171 = arith.constant 0 : index
    %c0_172 = arith.constant 0 : index
    %155 = vector.load %arg6[%c4_170, %c0_171, %c0_172] : memref<9x64x128xf32, #tpu.memory_space<vmem>>, vector<1x64x128xf32>
    %156 = vector.shape_cast %155 : vector<1x64x128xf32> to vector<64x128xf32>
    %cst_173 = arith.constant dense<0.000000e+00> : vector<1x128xf32>
    %157 = tpu.matmul %154, %156, %cst_173 {dimension_numbers = #tpu.dot_dimension_numbers<[1], [0], [0], [1], [0, 0, 1, 1], [], []>} : vector<1x64xf32>, vector<64x128xf32>, vector<1x128xf32> -> vector<1x128xf32>
    %158 = arith.addf %153, %157 : vector<1x128xf32>
    %c5_174 = arith.constant 5 : index
    %c0_175 = arith.constant 0 : index
    %159 = vector.load %arg9[%c5_174, %c0_175] : memref<16x64xf32, #tpu.memory_space<vmem>>, vector<1x64xf32>
    %c5_176 = arith.constant 5 : index
    %c0_177 = arith.constant 0 : index
    %c0_178 = arith.constant 0 : index
    %160 = vector.load %arg6[%c5_176, %c0_177, %c0_178] : memref<9x64x128xf32, #tpu.memory_space<vmem>>, vector<1x64x128xf32>
    %161 = vector.shape_cast %160 : vector<1x64x128xf32> to vector<64x128xf32>
    %cst_179 = arith.constant dense<0.000000e+00> : vector<1x128xf32>
    %162 = tpu.matmul %159, %161, %cst_179 {dimension_numbers = #tpu.dot_dimension_numbers<[1], [0], [0], [1], [0, 0, 1, 1], [], []>} : vector<1x64xf32>, vector<64x128xf32>, vector<1x128xf32> -> vector<1x128xf32>
    %163 = arith.addf %158, %162 : vector<1x128xf32>
    %c6_180 = arith.constant 6 : index
    %c0_181 = arith.constant 0 : index
    %164 = vector.load %arg9[%c6_180, %c0_181] : memref<16x64xf32, #tpu.memory_space<vmem>>, vector<1x64xf32>
    %c6_182 = arith.constant 6 : index
    %c0_183 = arith.constant 0 : index
    %c0_184 = arith.constant 0 : index
    %165 = vector.load %arg6[%c6_182, %c0_183, %c0_184] : memref<9x64x128xf32, #tpu.memory_space<vmem>>, vector<1x64x128xf32>
    %166 = vector.shape_cast %165 : vector<1x64x128xf32> to vector<64x128xf32>
    %cst_185 = arith.constant dense<0.000000e+00> : vector<1x128xf32>
    %167 = tpu.matmul %164, %166, %cst_185 {dimension_numbers = #tpu.dot_dimension_numbers<[1], [0], [0], [1], [0, 0, 1, 1], [], []>} : vector<1x64xf32>, vector<64x128xf32>, vector<1x128xf32> -> vector<1x128xf32>
    %168 = arith.addf %163, %167 : vector<1x128xf32>
    %c7_186 = arith.constant 7 : index
    %c0_187 = arith.constant 0 : index
    %169 = vector.load %arg9[%c7_186, %c0_187] : memref<16x64xf32, #tpu.memory_space<vmem>>, vector<1x64xf32>
    %c7_188 = arith.constant 7 : index
    %c0_189 = arith.constant 0 : index
    %c0_190 = arith.constant 0 : index
    %170 = vector.load %arg6[%c7_188, %c0_189, %c0_190] : memref<9x64x128xf32, #tpu.memory_space<vmem>>, vector<1x64x128xf32>
    %171 = vector.shape_cast %170 : vector<1x64x128xf32> to vector<64x128xf32>
    %cst_191 = arith.constant dense<0.000000e+00> : vector<1x128xf32>
    %172 = tpu.matmul %169, %171, %cst_191 {dimension_numbers = #tpu.dot_dimension_numbers<[1], [0], [0], [1], [0, 0, 1, 1], [], []>} : vector<1x64xf32>, vector<64x128xf32>, vector<1x128xf32> -> vector<1x128xf32>
    %173 = arith.addf %168, %172 : vector<1x128xf32>
    %c8_192 = arith.constant 8 : index
    %c0_193 = arith.constant 0 : index
    %174 = vector.load %arg9[%c8_192, %c0_193] : memref<16x64xf32, #tpu.memory_space<vmem>>, vector<1x64xf32>
    %c8_194 = arith.constant 8 : index
    %c0_195 = arith.constant 0 : index
    %c0_196 = arith.constant 0 : index
    %175 = vector.load %arg6[%c8_194, %c0_195, %c0_196] : memref<9x64x128xf32, #tpu.memory_space<vmem>>, vector<1x64x128xf32>
    %176 = vector.shape_cast %175 : vector<1x64x128xf32> to vector<64x128xf32>
    %cst_197 = arith.constant dense<0.000000e+00> : vector<1x128xf32>
    %177 = tpu.matmul %174, %176, %cst_197 {dimension_numbers = #tpu.dot_dimension_numbers<[1], [0], [0], [1], [0, 0, 1, 1], [], []>} : vector<1x64xf32>, vector<64x128xf32>, vector<1x128xf32> -> vector<1x128xf32>
    %178 = arith.addf %173, %177 : vector<1x128xf32>
    %c0_198 = arith.constant 0 : index
    %c0_199 = arith.constant 0 : index
    %179 = vector.load %arg8[%c0_198, %c0_199] : memref<1x128xf32, #tpu.memory_space<vmem>>, vector<1x128xf32>
    tpu.vector_store %arg8[%c0_198, %c0_199], %178 {strides = array<i32>} : memref<1x128xf32, #tpu.memory_space<vmem>>, vector<1x128xf32>,
    return
  }
}

</mosaic_0001>

<llo_original>
// kernel: embedding_net_forward.1
$region0: #{embedding_net_forward.1}
  #allocation0 [shape = 'u32[]', space=smem, size = 0x4, offset = 0x4, fixed_abs, tag = 'smem constant byte address 0x4 - core index']
  #allocation1 [shape = 'u32[72,128]{1,0:T(1,128)}', space=vmem, size = 0x9000, scoped, tag = 'internal scratch']
  #allocation2 [shape = 'f32[16,64]{1,0:T(8,128)}', space=vmem, size = 0x2000, scoped, tag = 'scratch operand']
  %s0 = inlined_call_operand.vmem [shape: f32[256,128], index: 0, kind: input, shape index: {}]
  %s1 = inlined_call_operand.vmem [shape: f32[9,56,256], index: 1, kind: input, shape index: {}]
  %s2 = inlined_call_operand.vmem [shape: f32[9,128,32], index: 2, kind: input, shape index: {}]
  %s3 = inlined_call_operand.vmem [shape: f32[9,16,56], index: 3, kind: input, shape index: {}]
  %s4 = inlined_call_operand.vmem [shape: f32[9,32,64], index: 4, kind: input, shape index: {}]
  %s5 = inlined_call_operand.vmem [shape: f32[1,64], index: 5, kind: input, shape index: {}]
  %s6 = inlined_call_operand.vmem [shape: f32[9,64,128], index: 6, kind: input, shape index: {}]
  %s7 = inlined_call_operand.vmem [shape: f32[1,128], index: 7, kind: input, shape index: {}]
  %s8 = inlined_call_operand.hbm [shape: f32[1,128], index: 8, kind: output, shape index: {}]
  %s9 = sld [smem:[#allocation0]]
  $region42: #{embedding_net_forward.1} parent=0
    _
  %s11 = ssub.s32 1, %s9
  %s12 = scalar_select 0, %s11, %s9
  $region1: #{embedding_net_forward.1} parent=0
    #allocation3 [shape = 'u8[512]{0}', space=vmem, size = 0x400, scoped, tag = 'output window, operand 0, single buffered']
    #allocation4 [shape = 's32[1]{0}', space=sflag, size = 0x4, scoped, tag = 'scoped memory for embedding_net_forward.1']
    %13 = vsyncpa [#allocation4], 0
    // Predicated region
    $region2: #{embedding_net_forward.1} parent=1 // pred_check
      _
    $region3: #{embedding_net_forward.1} parent=1 // pred_check_branch
      %15 = sbr.rel (0) target = $region5
    $region4: #{embedding_net_forward.1} parent=1 // pred_region
      _
    $region5: #{embedding_net_forward.1} parent=1 // pred_fallthru
      _
    // Predicated region
    $region6: #{embedding_net_forward.1} parent=1 // pred_check
      _
    $region7: #{embedding_net_forward.1} parent=1 // pred_check_branch
      %17 = sbr.rel (0) target = $region9
    $region8: #{embedding_net_forward.1} parent=1 // pred_region
      _
    $region9: #{embedding_net_forward.1} parent=1 // pred_fallthru
      _
    // Predicated region
    $region10: #{embedding_net_forward.1} parent=1 // pred_check
      _
    $region11: #{embedding_net_forward.1} parent=1 // pred_check_branch
      %19 = sbr.rel (0) target = $region13
    $region12: #{embedding_net_forward.1} parent=1 // pred_region
      _
    $region13: #{embedding_net_forward.1} parent=1 // pred_fallthru
      _
    // Predicated region
    $region14: #{embedding_net_forward.1} parent=1 // pred_check
      _
    $region15: #{embedding_net_forward.1} parent=1 // pred_check_branch
      %21 = sbr.rel (0) target = $region17
    $region16: #{embedding_net_forward.1} parent=1 // pred_region
      _
    $region17: #{embedding_net_forward.1} parent=1 // pred_fallthru
      _
    // Predicated region
    $region18: #{embedding_net_forward.1} parent=1 // pred_check
      _
    $region19: #{embedding_net_forward.1} parent=1 // pred_check_branch
      %23 = sbr.rel (0) target = $region21
    $region20: #{embedding_net_forward.1} parent=1 // pred_region
      _
    $region21: #{embedding_net_forward.1} parent=1 // pred_fallthru
      _
    // Predicated region
    $region22: #{embedding_net_forward.1} parent=1 // pred_check
      _
    $region23: #{embedding_net_forward.1} parent=1 // pred_check_branch
      %25 = sbr.rel (0) target = $region25
    $region24: #{embedding_net_forward.1} parent=1 // pred_region
      _
    $region25: #{embedding_net_forward.1} parent=1 // pred_fallthru
      _
    // Predicated region
    $region26: #{embedding_net_forward.1} parent=1 // pred_check
      _
    $region27: #{embedding_net_forward.1} parent=1 // pred_check_branch
      %27 = sbr.rel (0) target = $region29
    $region28: #{embedding_net_forward.1} parent=1 // pred_region
      _
    $region29: #{embedding_net_forward.1} parent=1 // pred_fallthru
      _
    // Predicated region
    $region30: #{embedding_net_forward.1} parent=1 // pred_check
      _
    $region31: #{embedding_net_forward.1} parent=1 // pred_check_branch
      %29 = sbr.rel (0) target = $region33
    $region32: #{embedding_net_forward.1} parent=1 // pred_region
      _
    $region33: #{embedding_net_forward.1} parent=1 // pred_fallthru
      _
    %v30 = vld [vmem:[%s0] sm:$0xff]
    %v31 = vld [vmem:[%s0 + $0x8] sm:$0xff]
    %v32 = vld [vmem:[%s0 + $0x10] sm:$0xff]
    %v33 = vld [vmem:[%s0 + $0x18] sm:$0xff]
    %v34 = vld [vmem:[%s0 + $0x20] sm:$0xff]
    %v35 = vld [vmem:[%s0 + $0x28] sm:$0xff]
    %v36 = vld [vmem:[%s0 + $0x30] sm:$0xff]
    %v37 = vld [vmem:[%s0 + $0x38] sm:$0xff]
    %v38 = vld [vmem:[%s0 + $0x40] sm:$0xff]
    %v39 = vld [vmem:[%s0 + $0x48] sm:$0xff]
    %v40 = vld [vmem:[%s0 + $0x50] sm:$0xff]
    %v41 = vld [vmem:[%s0 + $0x58] sm:$0xff]
    %v42 = vld [vmem:[%s0 + $0x60] sm:$0xff]
    %v43 = vld [vmem:[%s0 + $0x68] sm:$0xff]
    %v44 = vld [vmem:[%s0 + $0x70] sm:$0xff]
    %v45 = vld [vmem:[%s0 + $0x78] sm:$0xff]
    %v46 = vld [vmem:[%s0 + $0x80] sm:$0xff]
    %v47 = vld [vmem:[%s0 + $0x88] sm:$0xff]
    %v48 = vld [vmem:[%s0 + $0x90] sm:$0xff]
    %v49 = vld [vmem:[%s0 + $0x98] sm:$0xff]
    %v50 = vld [vmem:[%s0 + $0xa0] sm:$0xff]
    %v51 = vld [vmem:[%s0 + $0xa8] sm:$0xff]
    %v52 = vld [vmem:[%s0 + $0xb0] sm:$0xff]
    %v53 = vld [vmem:[%s0 + $0xb8] sm:$0xff]
    %v54 = vld [vmem:[%s0 + $0xc0] sm:$0xff]
    %v55 = vld [vmem:[%s0 + $0xc8] sm:$0xff]
    %v56 = vld [vmem:[%s0 + $0xd0] sm:$0xff]
    %v57 = vld [vmem:[%s0 + $0xd8] sm:$0xff]
    %v58 = vld [vmem:[%s0 + $0xe0] sm:$0xff]
    %v59 = vld [vmem:[%s0 + $0xe8] sm:$0xff]
    %v60 = vld [vmem:[%s0 + $0xf0] sm:$0xff]
    %v61 = vld [vmem:[%s0 + $0xf8] sm:$0xff]
    %v62 = vld [vmem:[%s1] sm:$0xff]
    %v63 = vld [vmem:[%s1 + $0x8] sm:$0xff]
    %v64 = vld [vmem:[%s1 + $0x10] sm:$0xff]
    %v65 = vld [vmem:[%s1 + $0x18] sm:$0xff]
    %v66 = vld [vmem:[%s1 + $0x20] sm:$0xff]
    %v67 = vld [vmem:[%s1 + $0x28] sm:$0xff]
    %v68 = vld [vmem:[%s1 + $0x30] sm:$0xff]
    %v69 = vld [vmem:[%s1 + $0x38] sm:$0xff]
    %v70 = vld [vmem:[%s1 + $0x40] sm:$0xff]
    %v71 = vld [vmem:[%s1 + $0x48] sm:$0xff]
    %v72 = vld [vmem:[%s1 + $0x50] sm:$0xff]
    %v73 = vld [vmem:[%s1 + $0x58] sm:$0xff]
    %v74 = vld [vmem:[%s1 + $0x60] sm:$0xff]
    %v75 = vld [vmem:[%s1 + $0x68] sm:$0xff]
    %76 = vmatpush.msra.mxu0 %v45
    %77 = vmatpush.msra.mxu0 %v44
    %78 = vmatpush.msra.mxu0 %v43
    %79 = vmatpush.msra.mxu0 %v42
    %80 = vmatpush.msra.mxu0 %v41
    %81 = vmatpush.msra.mxu0 %v40
    %82 = vmatpush.msra.mxu0 %v39
    %83 = vmatpush.msra.mxu0 %v38
    %84 = vmatpush.msra.mxu0 %v37
    %85 = vmatpush.msra.mxu0 %v36
    %86 = vmatpush.msra.mxu0 %v35
    %87 = vmatpush.msra.mxu0 %v34
    %88 = vmatpush.msra.mxu0 %v33
    %89 = vmatpush.msra.mxu0 %v32
    %90 = vmatpush.msra.mxu0 %v31
    %91 = vmatpush.msra.mxu0 %v30
    %92 = vmatmul.f32.gmra.mxu0 %v62
    %v93 = vpop.f32.mrf.mxu0
    %v94 = vadd.f32 0.0, %v93
    %95 = vmatmul.f32.gmra.mxu0 %v64
    %v96 = vpop.f32.mrf.mxu0
    %v97 = vadd.f32 0.0, %v96
    %98 = vmatmul.f32.gmra.mxu0 %v66
    %v99 = vpop.f32.mrf.mxu0
    %v100 = vadd.f32 0.0, %v99
    %101 = vmatmul.f32.gmra.mxu0 %v68
    %v102 = vpop.f32.mrf.mxu0
    %v103 = vadd.f32 0.0, %v102
    %104 = vmatmul.f32.gmra.mxu0 %v70
    %v105 = vpop.f32.mrf.mxu0
    %v106 = vadd.f32 0.0, %v105
    %107 = vmatmul.f32.gmra.mxu0 %v72
    %v108 = vpop.f32.mrf.mxu0
    %v109 = vadd.f32 0.0, %v108
    %110 = vmatmul.f32.gmra.mxu0 %v74
    %v111 = vpop.f32.mrf.mxu0
    %v112 = vadd.f32 0.0, %v111
    %113 = vdwg.mxu0
    %114 = vmatpush.msra.mxu0 %v61
    %115 = vmatpush.msra.mxu0 %v60
    %116 = vmatpush.msra.mxu0 %v59
    %117 = vmatpush.msra.mxu0 %v58
    %118 = vmatpush.msra.mxu0 %v57
    %119 = vmatpush.msra.mxu0 %v56
    %120 = vmatpush.msra.mxu0 %v55
    %121 = vmatpush.msra.mxu0 %v54
    %122 = vmatpush.msra.mxu0 %v53
    %123 = vmatpush.msra.mxu0 %v52
    %124 = vmatpush.msra.mxu0 %v51
    %125 = vmatpush.msra.mxu0 %v50
    %126 = vmatpush.msra.mxu0 %v49
    %127 = vmatpush.msra.mxu0 %v48
    %128 = vmatpush.msra.mxu0 %v47
    %129 = vmatpush.msra.mxu0 %v46
    %130 = vmatmul.f32.gmra.mxu0 %v63
    %v131 = vpop.f32.mrf.mxu0
    %v132 = vadd.f32 %v94, %v131
    %133 = vmatmul.f32.gmra.mxu0 %v65
    %v134 = vpop.f32.mrf.mxu0
    %v135 = vadd.f32 %v97, %v134
    %136 = vmatmul.f32.gmra.mxu0 %v67
    %v137 = vpop.f32.mrf.mxu0
    %v138 = vadd.f32 %v100, %v137
    %139 = vmatmul.f32.gmra.mxu0 %v69
    %v140 = vpop.f32.mrf.mxu0
    %v141 = vadd.f32 %v103, %v140
    %142 = vmatmul.f32.gmra.mxu0 %v71
    %v143 = vpop.f32.mrf.mxu0
    %v144 = vadd.f32 %v106, %v143
    %145 = vmatmul.f32.gmra.mxu0 %v73
    %v146 = vpop.f32.mrf.mxu0
    %v147 = vadd.f32 %v109, %v146
    %148 = vmatmul.f32.gmra.mxu0 %v75
    %v149 = vpop.f32.mrf.mxu0
    %v150 = vadd.f32 %v112, %v149
    %151 = vdwg.mxu0
    %v152 = vld [vmem:[%s2] sm:$0xff]
    %v153 = vld [vmem:[%s2 + $0x8] sm:$0xff]
    %v154 = vld [vmem:[%s2 + $0x10] sm:$0xff]
    %v155 = vld [vmem:[%s2 + $0x18] sm:$0xff]
    %v156 = vld [vmem:[%s2 + $0x20] sm:$0xff]
    %v157 = vld [vmem:[%s2 + $0x28] sm:$0xff]
    %v158 = vld [vmem:[%s2 + $0x30] sm:$0xff]
    %v159 = vld [vmem:[%s2 + $0x38] sm:$0xff]
    %v160 = vld [vmem:[%s2 + $0x40] sm:$0xff]
    %v161 = vld [vmem:[%s2 + $0x48] sm:$0xff]
    %v162 = vld [vmem:[%s2 + $0x50] sm:$0xff]
    %v163 = vld [vmem:[%s2 + $0x58] sm:$0xff]
    %v164 = vld [vmem:[%s2 + $0x60] sm:$0xff]
    %v165 = vld [vmem:[%s2 + $0x68] sm:$0xff]
    %v166 = vld [vmem:[%s2 + $0x70] sm:$0xff]
    %v167 = vld [vmem:[%s2 + $0x78] sm:$0xff]
    %s168 = scalar_lea.vmem %s1, 112
    %v169 = vld [vmem:[%s168] sm:$0xff]
    %v170 = vld [vmem:[%s168 + $0x8] sm:$0xff]
    %v171 = vld [vmem:[%s168 + $0x10] sm:$0xff]
    %v172 = vld [vmem:[%s168 + $0x18] sm:$0xff]
    %v173 = vld [vmem:[%s168 + $0x20] sm:$0xff]
    %v174 = vld [vmem:[%s168 + $0x28] sm:$0xff]
    %v175 = vld [vmem:[%s168 + $0x30] sm:$0xff]
    %v176 = vld [vmem:[%s168 + $0x38] sm:$0xff]
    %v177 = vld [vmem:[%s168 + $0x40] sm:$0xff]
    %v178 = vld [vmem:[%s168 + $0x48] sm:$0xff]
    %v179 = vld [vmem:[%s168 + $0x50] sm:$0xff]
    %v180 = vld [vmem:[%s168 + $0x58] sm:$0xff]
    %v181 = vld [vmem:[%s168 + $0x60] sm:$0xff]
    %v182 = vld [vmem:[%s168 + $0x68] sm:$0xff]
    %183 = vmatpush.msra.mxu0 %v45
    %184 = vmatpush.msra.mxu0 %v44
    %185 = vmatpush.msra.mxu0 %v43
    %186 = vmatpush.msra.mxu0 %v42
    %187 = vmatpush.msra.mxu0 %v41
    %188 = vmatpush.msra.mxu0 %v40
    %189 = vmatpush.msra.mxu0 %v39
    %190 = vmatpush.msra.mxu0 %v38
    %191 = vmatpush.msra.mxu0 %v37
    %192 = vmatpush.msra.mxu0 %v36
    %193 = vmatpush.msra.mxu0 %v35
    %194 = vmatpush.msra.mxu0 %v34
    %195 = vmatpush.msra.mxu0 %v33
    %196 = vmatpush.msra.mxu0 %v32
    %197 = vmatpush.msra.mxu0 %v31
    %198 = vmatpush.msra.mxu0 %v30
    %199 = vmatmul.f32.gmra.mxu0 %v169
    %v200 = vpop.f32.mrf.mxu0
    %v201 = vadd.f32 0.0, %v200
    %202 = vmatmul.f32.gmra.mxu0 %v171
    %v203 = vpop.f32.mrf.mxu0
    %v204 = vadd.f32 0.0, %v203
    %205 = vmatmul.f32.gmra.mxu0 %v173
    %v206 = vpop.f32.mrf.mxu0
    %v207 = vadd.f32 0.0, %v206
    %208 = vmatmul.f32.gmra.mxu0 %v175
    %v209 = vpop.f32.mrf.mxu0
    %v210 = vadd.f32 0.0, %v209
    %211 = vmatmul.f32.gmra.mxu0 %v177
    %v212 = vpop.f32.mrf.mxu0
    %v213 = vadd.f32 0.0, %v212
    %214 = vmatmul.f32.gmra.mxu0 %v179
    %v215 = vpop.f32.mrf.mxu0
    %v216 = vadd.f32 0.0, %v215
    %217 = vmatmul.f32.gmra.mxu0 %v181
    %v218 = vpop.f32.mrf.mxu0
    %v219 = vadd.f32 0.0, %v218
    %220 = vdwg.mxu0
    %221 = vmatpush.msra.mxu0 %v61
    %222 = vmatpush.msra.mxu0 %v60
    %223 = vmatpush.msra.mxu0 %v59
    %224 = vmatpush.msra.mxu0 %v58
    %225 = vmatpush.msra.mxu0 %v57
    %226 = vmatpush.msra.mxu0 %v56
    %227 = vmatpush.msra.mxu0 %v55
    %228 = vmatpush.msra.mxu0 %v54
    %229 = vmatpush.msra.mxu0 %v53
    %230 = vmatpush.msra.mxu0 %v52
    %231 = vmatpush.msra.mxu0 %v51
    %232 = vmatpush.msra.mxu0 %v50
    %233 = vmatpush.msra.mxu0 %v49
    %234 = vmatpush.msra.mxu0 %v48
    %235 = vmatpush.msra.mxu0 %v47
    %236 = vmatpush.msra.mxu0 %v46
    %237 = vmatmul.f32.gmra.mxu0 %v170
    %v238 = vpop.f32.mrf.mxu0
    %v239 = vadd.f32 %v201, %v238
    %240 = vmatmul.f32.gmra.mxu0 %v172
    %v241 = vpop.f32.mrf.mxu0
    %v242 = vadd.f32 %v204, %v241
    %243 = vmatmul.f32.gmra.mxu0 %v174
    %v244 = vpop.f32.mrf.mxu0
    %v245 = vadd.f32 %v207, %v244
    %246 = vmatmul.f32.gmra.mxu0 %v176
    %v247 = vpop.f32.mrf.mxu0
    %v248 = vadd.f32 %v210, %v247
    %249 = vmatmul.f32.gmra.mxu0 %v178
    %v250 = vpop.f32.mrf.mxu0
    %v251 = vadd.f32 %v213, %v250
    %252 = vmatmul.f32.gmra.mxu0 %v180
    %v253 = vpop.f32.mrf.mxu0
    %v254 = vadd.f32 %v216, %v253
    %255 = vmatmul.f32.gmra.mxu0 %v182
    %v256 = vpop.f32.mrf.mxu0
    %v257 = vadd.f32 %v219, %v256
    %258 = vdwg.mxu0
    %s259 = scalar_lea.vmem %s2, 128
    %v260 = vld [vmem:[%s259] sm:$0xff]
    %v261 = vld [vmem:[%s259 + $0x8] sm:$0xff]
    %v262 = vld [vmem:[%s259 + $0x10] sm:$0xff]
    %v263 = vld [vmem:[%s259 + $0x18] sm:$0xff]
    %v264 = vld [vmem:[%s259 + $0x20] sm:$0xff]
    %v265 = vld [vmem:[%s259 + $0x28] sm:$0xff]
    %v266 = vld [vmem:[%s259 + $0x30] sm:$0xff]
    %v267 = vld [vmem:[%s259 + $0x38] sm:$0xff]
    %v268 = vld [vmem:[%s259 + $0x40] sm:$0xff]
    %v269 = vld [vmem:[%s259 + $0x48] sm:$0xff]
    %v270 = vld [vmem:[%s259 + $0x50] sm:$0xff]
    %v271 = vld [vmem:[%s259 + $0x58] sm:$0xff]
    %v272 = vld [vmem:[%s259 + $0x60] sm:$0xff]
    %v273 = vld [vmem:[%s259 + $0x68] sm:$0xff]
    %v274 = vld [vmem:[%s259 + $0x70] sm:$0xff]
    %v275 = vld [vmem:[%s259 + $0x78] sm:$0xff]
    %276 = vmatpush.msra.mxu0 %v275
    %277 = vmatpush.msra.mxu0 %v274
    %278 = vmatpush.msra.mxu0 %v273
    %279 = vmatpush.msra.mxu0 %v272
    %280 = vmatpush.msra.mxu0 %v271
    %281 = vmatpush.msra.mxu0 %v270
    %282 = vmatpush.msra.mxu0 %v269
    %283 = vmatpush.msra.mxu0 %v268
    %284 = vmatpush.msra.mxu0 %v267
    %285 = vmatpush.msra.mxu0 %v266
    %286 = vmatpush.msra.mxu0 %v265
    %287 = vmatpush.msra.mxu0 %v264
    %288 = vmatpush.msra.mxu0 %v263
    %289 = vmatpush.msra.mxu0 %v262
    %290 = vmatpush.msra.mxu0 %v261
    %291 = vmatpush.msra.mxu0 %v260
    %292 = vmatmul.f32.gmra.mxu0 %v239
    %v293 = vpop.f32.mrf.mxu0
    %v294 = vadd.f32 0.0, %v293
    %295 = vmatmul.f32.gmra.mxu0 %v242
    %v296 = vpop.f32.mrf.mxu0
    %v297 = vadd.f32 0.0, %v296
    %298 = vmatmul.f32.gmra.mxu0 %v245
    %v299 = vpop.f32.mrf.mxu0
    %v300 = vadd.f32 0.0, %v299
    %301 = vmatmul.f32.gmra.mxu0 %v248
    %v302 = vpop.f32.mrf.mxu0
    %v303 = vadd.f32 0.0, %v302
    %304 = vmatmul.f32.gmra.mxu0 %v251
    %v305 = vpop.f32.mrf.mxu0
    %v306 = vadd.f32 0.0, %v305
    %307 = vmatmul.f32.gmra.mxu0 %v254
    %v308 = vpop.f32.mrf.mxu0
    %v309 = vadd.f32 0.0, %v308
    %310 = vmatmul.f32.gmra.mxu0 %v257
    %v311 = vpop.f32.mrf.mxu0
    %v312 = vadd.f32 0.0, %v311
    %313 = vdwg.mxu0
    %314 = vmatpush.msra.mxu0 %v167
    %315 = vmatpush.msra.mxu0 %v166
    %316 = vmatpush.msra.mxu0 %v165
    %317 = vmatpush.msra.mxu0 %v164
    %318 = vmatpush.msra.mxu0 %v163
    %319 = vmatpush.msra.mxu0 %v162
    %320 = vmatpush.msra.mxu0 %v161
    %321 = vmatpush.msra.mxu0 %v160
    %322 = vmatpush.msra.mxu0 %v159
    %323 = vmatpush.msra.mxu0 %v158
    %324 = vmatpush.msra.mxu0 %v157
    %325 = vmatpush.msra.mxu0 %v156
    %326 = vmatpush.msra.mxu0 %v155
    %327 = vmatpush.msra.mxu0 %v154
    %328 = vmatpush.msra.mxu0 %v153
    %329 = vmatpush.msra.mxu0 %v152
    %330 = vmatmul.f32.gmra.mxu0 %v132
    %v331 = vpop.f32.mrf.mxu0
    %v332 = vadd.f32 %v294, %v331
    %333 = vmatmul.f32.gmra.mxu0 %v135
    %v334 = vpop.f32.mrf.mxu0
    %v335 = vadd.f32 %v297, %v334
    %336 = vmatmul.f32.gmra.mxu0 %v138
    %v337 = vpop.f32.mrf.mxu0
    %v338 = vadd.f32 %v300, %v337
    %339 = vmatmul.f32.gmra.mxu0 %v141
    %v340 = vpop.f32.mrf.mxu0
    %v341 = vadd.f32 %v303, %v340
    %342 = vmatmul.f32.gmra.mxu0 %v144
    %v343 = vpop.f32.mrf.mxu0
    %v344 = vadd.f32 %v306, %v343
    %345 = vmatmul.f32.gmra.mxu0 %v147
    %v346 = vpop.f32.mrf.mxu0
    %v347 = vadd.f32 %v309, %v346
    %348 = vmatmul.f32.gmra.mxu0 %v150
    %v349 = vpop.f32.mrf.mxu0
    %v350 = vadd.f32 %v312, %v349
    %351 = vdwg.mxu0
    %s352 = scalar_lea.vmem %s1, 224
    %v353 = vld [vmem:[%s352] sm:$0xff]
    %v354 = vld [vmem:[%s352 + $0x8] sm:$0xff]
    %v355 = vld [vmem:[%s352 + $0x10] sm:$0xff]
    %v356 = vld [vmem:[%s352 + $0x18] sm:$0xff]
    %v357 = vld [vmem:[%s352 + $0x20] sm:$0xff]
    %v358 = vld [vmem:[%s352 + $0x28] sm:$0xff]
    %v359 = vld [vmem:[%s352 + $0x30] sm:$0xff]
    %v360 = vld [vmem:[%s352 + $0x38] sm:$0xff]
    %v361 = vld [vmem:[%s352 + $0x40] sm:$0xff]
    %v362 = vld [vmem:[%s352 + $0x48] sm:$0xff]
    %v363 = vld [vmem:[%s352 + $0x50] sm:$0xff]
    %v364 = vld [vmem:[%s352 + $0x58] sm:$0xff]
    %v365 = vld [vmem:[%s352 + $0x60] sm:$0xff]
    %v366 = vld [vmem:[%s352 + $0x68] sm:$0xff]
    %367 = vmatpush.msra.mxu0 %v45
    %368 = vmatpush.msra.mxu0 %v44
    %369 = vmatpush.msra.mxu0 %v43
    %370 = vmatpush.msra.mxu0 %v42
    %371 = vmatpush.msra.mxu0 %v41
    %372 = vmatpush.msra.mxu0 %v40
    %373 = vmatpush.msra.mxu0 %v39
    %374 = vmatpush.msra.mxu0 %v38
    %375 = vmatpush.msra.mxu0 %v37
    %376 = vmatpush.msra.mxu0 %v36
    %377 = vmatpush.msra.mxu0 %v35
    %378 = vmatpush.msra.mxu0 %v34
    %379 = vmatpush.msra.mxu0 %v33
    %380 = vmatpush.msra.mxu0 %v32
    %381 = vmatpush.msra.mxu0 %v31
    %382 = vmatpush.msra.mxu0 %v30
    %383 = vmatmul.f32.gmra.mxu0 %v353
    %v384 = vpop.f32.mrf.mxu0
    %v385 = vadd.f32 0.0, %v384
    %386 = vmatmul.f32.gmra.mxu0 %v355
    %v387 = vpop.f32.mrf.mxu0
    %v388 = vadd.f32 0.0, %v387
    %389 = vmatmul.f32.gmra.mxu0 %v357
    %v390 = vpop.f32.mrf.mxu0
    %v391 = vadd.f32 0.0, %v390
    %392 = vmatmul.f32.gmra.mxu0 %v359
    %v393 = vpop.f32.mrf.mxu0
    %v394 = vadd.f32 0.0, %v393
    %395 = vmatmul.f32.gmra.mxu0 %v361
    %v396 = vpop.f32.mrf.mxu0
    %v397 = vadd.f32 0.0, %v396
    %398 = vmatmul.f32.gmra.mxu0 %v363
    %v399 = vpop.f32.mrf.mxu0
    %v400 = vadd.f32 0.0, %v399
    %401 = vmatmul.f32.gmra.mxu0 %v365
    %v402 = vpop.f32.mrf.mxu0
    %v403 = vadd.f32 0.0, %v402
    %404 = vdwg.mxu0
    %405 = vmatpush.msra.mxu0 %v61
    %406 = vmatpush.msra.mxu0 %v60
    %407 = vmatpush.msra.mxu0 %v59
    %408 = vmatpush.msra.mxu0 %v58
    %409 = vmatpush.msra.mxu0 %v57
    %410 = vmatpush.msra.mxu0 %v56
    %411 = vmatpush.msra.mxu0 %v55
    %412 = vmatpush.msra.mxu0 %v54
    %413 = vmatpush.msra.mxu0 %v53
    %414 = vmatpush.msra.mxu0 %v52
    %415 = vmatpush.msra.mxu0 %v51
    %416 = vmatpush.msra.mxu0 %v50
    %417 = vmatpush.msra.mxu0 %v49
    %418 = vmatpush.msra.mxu0 %v48
    %419 = vmatpush.msra.mxu0 %v47
    %420 = vmatpush.msra.mxu0 %v46
    %421 = vmatmul.f32.gmra.mxu0 %v354
    %v422 = vpop.f32.mrf.mxu0
    %v423 = vadd.f32 %v385, %v422
    %424 = vmatmul.f32.gmra.mxu0 %v356
    %v425 = vpop.f32.mrf.mxu0
    %v426 = vadd.f32 %v388, %v425
    %427 = vmatmul.f32.gmra.mxu0 %v358
    %v428 = vpop.f32.mrf.mxu0
    %v429 = vadd.f32 %v391, %v428
    %430 = vmatmul.f32.gmra.mxu0 %v360
    %v431 = vpop.f32.mrf.mxu0
    %v432 = vadd.f32 %v394, %v431
    %433 = vmatmul.f32.gmra.mxu0 %v362
    %v434 = vpop.f32.mrf.mxu0
    %v435 = vadd.f32 %v397, %v434
    %436 = vmatmul.f32.gmra.mxu0 %v364
    %v437 = vpop.f32.mrf.mxu0
    %v438 = vadd.f32 %v400, %v437
    %439 = vmatmul.f32.gmra.mxu0 %v366
    %v440 = vpop.f32.mrf.mxu0
    %v441 = vadd.f32 %v403, %v440
    %442 = vdwg.mxu0
    %s443 = scalar_lea.vmem %s2, 256
    %v444 = vld [vmem:[%s443] sm:$0xff]
    %v445 = vld [vmem:[%s443 + $0x8] sm:$0xff]
    %v446 = vld [vmem:[%s443 + $0x10] sm:$0xff]
    %v447 = vld [vmem:[%s443 + $0x18] sm:$0xff]
    %v448 = vld [vmem:[%s443 + $0x20] sm:$0xff]
    %v449 = vld [vmem:[%s443 + $0x28] sm:$0xff]
    %v450 = vld [vmem:[%s443 + $0x30] sm:$0xff]
    %v451 = vld [vmem:[%s443 + $0x38] sm:$0xff]
    %v452 = vld [vmem:[%s443 + $0x40] sm:$0xff]
    %v453 = vld [vmem:[%s443 + $0x48] sm:$0xff]
    %v454 = vld [vmem:[%s443 + $0x50] sm:$0xff]
    %v455 = vld [vmem:[%s443 + $0x58] sm:$0xff]
    %v456 = vld [vmem:[%s443 + $0x60] sm:$0xff]
    %v457 = vld [vmem:[%s443 + $0x68] sm:$0xff]
    %v458 = vld [vmem:[%s443 + $0x70] sm:$0xff]
    %v459 = vld [vmem:[%s443 + $0x78] sm:$0xff]
    %460 = vmatpush.msra.mxu0 %v459
    %461 = vmatpush.msra.mxu0 %v458
    %462 = vmatpush.msra.mxu0 %v457
    %463 = vmatpush.msra.mxu0 %v456
    %464 = vmatpush.msra.mxu0 %v455
    %465 = vmatpush.msra.mxu0 %v454
    %466 = vmatpush.msra.mxu0 %v453
    %467 = vmatpush.msra.mxu0 %v452
    %468 = vmatpush.msra.mxu0 %v451
    %469 = vmatpush.msra.mxu0 %v450
    %470 = vmatpush.msra.mxu0 %v449
    %471 = vmatpush.msra.mxu0 %v448
    %472 = vmatpush.msra.mxu0 %v447
    %473 = vmatpush.msra.mxu0 %v446
    %474 = vmatpush.msra.mxu0 %v445
    %475 = vmatpush.msra.mxu0 %v444
    %476 = vmatmul.f32.gmra.mxu0 %v423
    %v477 = vpop.f32.mrf.mxu0
    %v478 = vadd.f32 0.0, %v477
    %479 = vmatmul.f32.gmra.mxu0 %v426
    %v480 = vpop.f32.mrf.mxu0
    %v481 = vadd.f32 0.0, %v480
    %482 = vmatmul.f32.gmra.mxu0 %v429
    %v483 = vpop.f32.mrf.mxu0
    %v484 = vadd.f32 0.0, %v483
    %485 = vmatmul.f32.gmra.mxu0 %v432
    %v486 = vpop.f32.mrf.mxu0
    %v487 = vadd.f32 0.0, %v486
    %488 = vmatmul.f32.gmra.mxu0 %v435
    %v489 = vpop.f32.mrf.mxu0
    %v490 = vadd.f32 0.0, %v489
    %491 = vmatmul.f32.gmra.mxu0 %v438
    %v492 = vpop.f32.mrf.mxu0
    %v493 = vadd.f32 0.0, %v492
    %494 = vmatmul.f32.gmra.mxu0 %v441
    %v495 = vpop.f32.mrf.mxu0
    %v496 = vadd.f32 0.0, %v495
    %497 = vdwg.mxu0
    %v498 = vadd.f32 %v332, %v478
    %v499 = vadd.f32 %v335, %v481
    %v500 = vadd.f32 %v338, %v484
    %v501 = vadd.f32 %v341, %v487
    %v502 = vadd.f32 %v344, %v490
    %v503 = vadd.f32 %v347, %v493
    %v504 = vadd.f32 %v350, %v496
    %s505 = scalar_lea.vmem %s1, 336
    %v506 = vld [vmem:[%s505] sm:$0xff]
    %v507 = vld [vmem:[%s505 + $0x8] sm:$0xff]
    %v508 = vld [vmem:[%s505 + $0x10] sm:$0xff]
    %v509 = vld [vmem:[%s505 + $0x18] sm:$0xff]
    %v510 = vld [vmem:[%s505 + $0x20] sm:$0xff]
    %v511 = vld [vmem:[%s505 + $0x28] sm:$0xff]
    %v512 = vld [vmem:[%s505 + $0x30] sm:$0xff]
    %v513 = vld [vmem:[%s505 + $0x38] sm:$0xff]
    %v514 = vld [vmem:[%s505 + $0x40] sm:$0xff]
    %v515 = vld [vmem:[%s505 + $0x48] sm:$0xff]
    %v516 = vld [vmem:[%s505 + $0x50] sm:$0xff]
    %v517 = vld [vmem:[%s505 + $0x58] sm:$0xff]
    %v518 = vld [vmem:[%s505 + $0x60] sm:$0xff]
    %v519 = vld [vmem:[%s505 + $0x68] sm:$0xff]
    %520 = vmatpush.msra.mxu0 %v45
    %521 = vmatpush.msra.mxu0 %v44
    %522 = vmatpush.msra.mxu0 %v43
    %523 = vmatpush.msra.mxu0 %v42
    %524 = vmatpush.msra.mxu0 %v41
    %525 = vmatpush.msra.mxu0 %v40
    %526 = vmatpush.msra.mxu0 %v39
    %527 = vmatpush.msra.mxu0 %v38
    %528 = vmatpush.msra.mxu0 %v37
    %529 = vmatpush.msra.mxu0 %v36
    %530 = vmatpush.msra.mxu0 %v35
    %531 = vmatpush.msra.mxu0 %v34
    %532 = vmatpush.msra.mxu0 %v33
    %533 = vmatpush.msra.mxu0 %v32
    %534 = vmatpush.msra.mxu0 %v31
    %535 = vmatpush.msra.mxu0 %v30
    %536 = vmatmul.f32.gmra.mxu0 %v506
    %v537 = vpop.f32.mrf.mxu0
    %v538 = vadd.f32 0.0, %v537
    %539 = vmatmul.f32.gmra.mxu0 %v508
    %v540 = vpop.f32.mrf.mxu0
    %v541 = vadd.f32 0.0, %v540
    %542 = vmatmul.f32.gmra.mxu0 %v510
    %v543 = vpop.f32.mrf.mxu0
    %v544 = vadd.f32 0.0, %v543
    %545 = vmatmul.f32.gmra.mxu0 %v512
    %v546 = vpop.f32.mrf.mxu0
    %v547 = vadd.f32 0.0, %v546
    %548 = vmatmul.f32.gmra.mxu0 %v514
    %v549 = vpop.f32.mrf.mxu0
    %v550 = vadd.f32 0.0, %v549
    %551 = vmatmul.f32.gmra.mxu0 %v516
    %v552 = vpop.f32.mrf.mxu0
    %v553 = vadd.f32 0.0, %v552
    %554 = vmatmul.f32.gmra.mxu0 %v518
    %v555 = vpop.f32.mrf.mxu0
    %v556 = vadd.f32 0.0, %v555
    %557 = vdwg.mxu0
    %558 = vmatpush.msra.mxu0 %v61
    %559 = vmatpush.msra.mxu0 %v60
    %560 = vmatpush.msra.mxu0 %v59
    %561 = vmatpush.msra.mxu0 %v58
    %562 = vmatpush.msra.mxu0 %v57
    %563 = vmatpush.msra.mxu0 %v56
    %564 = vmatpush.msra.mxu0 %v55
    %565 = vmatpush.msra.mxu0 %v54
    %566 = vmatpush.msra.mxu0 %v53
    %567 = vmatpush.msra.mxu0 %v52
    %568 = vmatpush.msra.mxu0 %v51
    %569 = vmatpush.msra.mxu0 %v50
    %570 = vmatpush.msra.mxu0 %v49
    %571 = vmatpush.msra.mxu0 %v48
    %572 = vmatpush.msra.mxu0 %v47
    %573 = vmatpush.msra.mxu0 %v46
    %574 = vmatmul.f32.gmra.mxu0 %v507
    %v575 = vpop.f32.mrf.mxu0
    %v576 = vadd.f32 %v538, %v575
    %577 = vmatmul.f32.gmra.mxu0 %v509
    %v578 = vpop.f32.mrf.mxu0
    %v579 = vadd.f32 %v541, %v578
    %580 = vmatmul.f32.gmra.mxu0 %v511
    %v581 = vpop.f32.mrf.mxu0
    %v582 = vadd.f32 %v544, %v581
    %583 = vmatmul.f32.gmra.mxu0 %v513
    %v584 = vpop.f32.mrf.mxu0
    %v585 = vadd.f32 %v547, %v584
    %586 = vmatmul.f32.gmra.mxu0 %v515
    %v587 = vpop.f32.mrf.mxu0
    %v588 = vadd.f32 %v550, %v587
    %589 = vmatmul.f32.gmra.mxu0 %v517
    %v590 = vpop.f32.mrf.mxu0
    %v591 = vadd.f32 %v553, %v590
    %592 = vmatmul.f32.gmra.mxu0 %v519
    %v593 = vpop.f32.mrf.mxu0
    %v594 = vadd.f32 %v556, %v593
    %595 = vdwg.mxu0
    %s596 = scalar_lea.vmem %s2, 384
    %v597 = vld [vmem:[%s596] sm:$0xff]
    %v598 = vld [vmem:[%s596 + $0x8] sm:$0xff]
    %v599 = vld [vmem:[%s596 + $0x10] sm:$0xff]
    %v600 = vld [vmem:[%s596 + $0x18] sm:$0xff]
    %v601 = vld [vmem:[%s596 + $0x20] sm:$0xff]
    %v602 = vld [vmem:[%s596 + $0x28] sm:$0xff]
    %v603 = vld [vmem:[%s596 + $0x30] sm:$0xff]
    %v604 = vld [vmem:[%s596 + $0x38] sm:$0xff]
    %v605 = vld [vmem:[%s596 + $0x40] sm:$0xff]
    %v606 = vld [vmem:[%s596 + $0x48] sm:$0xff]
    %v607 = vld [vmem:[%s596 + $0x50] sm:$0xff]
    %v608 = vld [vmem:[%s596 + $0x58] sm:$0xff]
    %v609 = vld [vmem:[%s596 + $0x60] sm:$0xff]
    %v610 = vld [vmem:[%s596 + $0x68] sm:$0xff]
    %v611 = vld [vmem:[%s596 + $0x70] sm:$0xff]
    %v612 = vld [vmem:[%s596 + $0x78] sm:$0xff]
    %613 = vmatpush.msra.mxu0 %v612
    %614 = vmatpush.msra.mxu0 %v611
    %615 = vmatpush.msra.mxu0 %v610
    %616 = vmatpush.msra.mxu0 %v609
    %617 = vmatpush.msra.mxu0 %v608
    %618 = vmatpush.msra.mxu0 %v607
    %619 = vmatpush.msra.mxu0 %v606
    %620 = vmatpush.msra.mxu0 %v605
    %621 = vmatpush.msra.mxu0 %v604
    %622 = vmatpush.msra.mxu0 %v603
    %623 = vmatpush.msra.mxu0 %v602
    %624 = vmatpush.msra.mxu0 %v601
    %625 = vmatpush.msra.mxu0 %v600
    %626 = vmatpush.msra.mxu0 %v599
    %627 = vmatpush.msra.mxu0 %v598
    %628 = vmatpush.msra.mxu0 %v597
    %629 = vmatmul.f32.gmra.mxu0 %v576
    %v630 = vpop.f32.mrf.mxu0
    %v631 = vadd.f32 0.0, %v630
    %632 = vmatmul.f32.gmra.mxu0 %v579
    %v633 = vpop.f32.mrf.mxu0
    %v634 = vadd.f32 0.0, %v633
    %635 = vmatmul.f32.gmra.mxu0 %v582
    %v636 = vpop.f32.mrf.mxu0
    %v637 = vadd.f32 0.0, %v636
    %638 = vmatmul.f32.gmra.mxu0 %v585
    %v639 = vpop.f32.mrf.mxu0
    %v640 = vadd.f32 0.0, %v639
    %641 = vmatmul.f32.gmra.mxu0 %v588
    %v642 = vpop.f32.mrf.mxu0
    %v643 = vadd.f32 0.0, %v642
    %644 = vmatmul.f32.gmra.mxu0 %v591
    %v645 = vpop.f32.mrf.mxu0
    %v646 = vadd.f32 0.0, %v645
    %647 = vmatmul.f32.gmra.mxu0 %v594
    %v648 = vpop.f32.mrf.mxu0
    %v649 = vadd.f32 0.0, %v648
    %650 = vdwg.mxu0
    %v651 = vadd.f32 %v498, %v631
    %v652 = vadd.f32 %v499, %v634
    %v653 = vadd.f32 %v500, %v637
    %v654 = vadd.f32 %v501, %v640
    %v655 = vadd.f32 %v502, %v643
    %v656 = vadd.f32 %v503, %v646
    %v657 = vadd.f32 %v504, %v649
    %s658 = scalar_lea.vmem %s1, 448
    %v659 = vld [vmem:[%s658] sm:$0xff]
    %v660 = vld [vmem:[%s658 + $0x8] sm:$0xff]
    %v661 = vld [vmem:[%s658 + $0x10] sm:$0xff]
    %v662 = vld [vmem:[%s658 + $0x18] sm:$0xff]
    %v663 = vld [vmem:[%s658 + $0x20] sm:$0xff]
    %v664 = vld [vmem:[%s658 + $0x28] sm:$0xff]
    %v665 = vld [vmem:[%s658 + $0x30] sm:$0xff]
    %v666 = vld [vmem:[%s658 + $0x38] sm:$0xff]
    %v667 = vld [vmem:[%s658 + $0x40] sm:$0xff]
    %v668 = vld [vmem:[%s658 + $0x48] sm:$0xff]
    %v669 = vld [vmem:[%s658 + $0x50] sm:$0xff]
    %v670 = vld [vmem:[%s658 + $0x58] sm:$0xff]
    %v671 = vld [vmem:[%s658 + $0x60] sm:$0xff]
    %v672 = vld [vmem:[%s658 + $0x68] sm:$0xff]
    %673 = vmatpush.msra.mxu0 %v45
    %674 = vmatpush.msra.mxu0 %v44
    %675 = vmatpush.msra.mxu0 %v43
    %676 = vmatpush.msra.mxu0 %v42
    %677 = vmatpush.msra.mxu0 %v41
    %678 = vmatpush.msra.mxu0 %v40
    %679 = vmatpush.msra.mxu0 %v39
    %680 = vmatpush.msra.mxu0 %v38
    %681 = vmatpush.msra.mxu0 %v37
    %682 = vmatpush.msra.mxu0 %v36
    %683 = vmatpush.msra.mxu0 %v35
    %684 = vmatpush.msra.mxu0 %v34
    %685 = vmatpush.msra.mxu0 %v33
    %686 = vmatpush.msra.mxu0 %v32
    %687 = vmatpush.msra.mxu0 %v31
    %688 = vmatpush.msra.mxu0 %v30
    %689 = vmatmul.f32.gmra.mxu0 %v659
    %v690 = vpop.f32.mrf.mxu0
    %v691 = vadd.f32 0.0, %v690
    %692 = vmatmul.f32.gmra.mxu0 %v661
    %v693 = vpop.f32.mrf.mxu0
    %v694 = vadd.f32 0.0, %v693
    %695 = vmatmul.f32.gmra.mxu0 %v663
    %v696 = vpop.f32.mrf.mxu0
    %v697 = vadd.f32 0.0, %v696
    %698 = vmatmul.f32.gmra.mxu0 %v665
    %v699 = vpop.f32.mrf.mxu0
    %v700 = vadd.f32 0.0, %v699
    %701 = vmatmul.f32.gmra.mxu0 %v667
    %v702 = vpop.f32.mrf.mxu0
    %v703 = vadd.f32 0.0, %v702
    %704 = vmatmul.f32.gmra.mxu0 %v669
    %v705 = vpop.f32.mrf.mxu0
    %v706 = vadd.f32 0.0, %v705
    %707 = vmatmul.f32.gmra.mxu0 %v671
    %v708 = vpop.f32.mrf.mxu0
    %v709 = vadd.f32 0.0, %v708
    %710 = vdwg.mxu0
    %711 = vmatpush.msra.mxu0 %v61
    %712 = vmatpush.msra.mxu0 %v60
    %713 = vmatpush.msra.mxu0 %v59
    %714 = vmatpush.msra.mxu0 %v58
    %715 = vmatpush.msra.mxu0 %v57
    %716 = vmatpush.msra.mxu0 %v56
    %717 = vmatpush.msra.mxu0 %v55
    %718 = vmatpush.msra.mxu0 %v54
    %719 = vmatpush.msra.mxu0 %v53
    %720 = vmatpush.msra.mxu0 %v52
    %721 = vmatpush.msra.mxu0 %v51
    %722 = vmatpush.msra.mxu0 %v50
    %723 = vmatpush.msra.mxu0 %v49
    %724 = vmatpush.msra.mxu0 %v48
    %725 = vmatpush.msra.mxu0 %v47
    %726 = vmatpush.msra.mxu0 %v46
    %727 = vmatmul.f32.gmra.mxu0 %v660
    %v728 = vpop.f32.mrf.mxu0
    %v729 = vadd.f32 %v691, %v728
    %730 = vmatmul.f32.gmra.mxu0 %v662
    %v731 = vpop.f32.mrf.mxu0
    %v732 = vadd.f32 %v694, %v731
    %733 = vmatmul.f32.gmra.mxu0 %v664
    %v734 = vpop.f32.mrf.mxu0
    %v735 = vadd.f32 %v697, %v734
    %736 = vmatmul.f32.gmra.mxu0 %v666
    %v737 = vpop.f32.mrf.mxu0
    %v738 = vadd.f32 %v700, %v737
    %739 = vmatmul.f32.gmra.mxu0 %v668
    %v740 = vpop.f32.mrf.mxu0
    %v741 = vadd.f32 %v703, %v740
    %742 = vmatmul.f32.gmra.mxu0 %v670
    %v743 = vpop.f32.mrf.mxu0
    %v744 = vadd.f32 %v706, %v743
    %745 = vmatmul.f32.gmra.mxu0 %v672
    %v746 = vpop.f32.mrf.mxu0
    %v747 = vadd.f32 %v709, %v746
    %748 = vdwg.mxu0
    %s749 = scalar_lea.vmem %s2, 512
    %v750 = vld [vmem:[%s749] sm:$0xff]
    %v751 = vld [vmem:[%s749 + $0x8] sm:$0xff]
    %v752 = vld [vmem:[%s749 + $0x10] sm:$0xff]
    %v753 = vld [vmem:[%s749 + $0x18] sm:$0xff]
    %v754 = vld [vmem:[%s749 + $0x20] sm:$0xff]
    %v755 = vld [vmem:[%s749 + $0x28] sm:$0xff]
    %v756 = vld [vmem:[%s749 + $0x30] sm:$0xff]
    %v757 = vld [vmem:[%s749 + $0x38] sm:$0xff]
    %v758 = vld [vmem:[%s749 + $0x40] sm:$0xff]
    %v759 = vld [vmem:[%s749 + $0x48] sm:$0xff]
    %v760 = vld [vmem:[%s749 + $0x50] sm:$0xff]
    %v761 = vld [vmem:[%s749 + $0x58] sm:$0xff]
    %v762 = vld [vmem:[%s749 + $0x60] sm:$0xff]
    %v763 = vld [vmem:[%s749 + $0x68] sm:$0xff]
    %v764 = vld [vmem:[%s749 + $0x70] sm:$0xff]
    %v765 = vld [vmem:[%s749 + $0x78] sm:$0xff]
    %766 = vmatpush.msra.mxu0 %v765
    %767 = vmatpush.msra.mxu0 %v764
    %768 = vmatpush.msra.mxu0 %v763
    %769 = vmatpush.msra.mxu0 %v762
    %770 = vmatpush.msra.mxu0 %v761
    %771 = vmatpush.msra.mxu0 %v760
    %772 = vmatpush.msra.mxu0 %v759
    %773 = vmatpush.msra.mxu0 %v758
    %774 = vmatpush.msra.mxu0 %v757
    %775 = vmatpush.msra.mxu0 %v756
    %776 = vmatpush.msra.mxu0 %v755
    %777 = vmatpush.msra.mxu0 %v754
    %778 = vmatpush.msra.mxu0 %v753
    %779 = vmatpush.msra.mxu0 %v752
    %780 = vmatpush.msra.mxu0 %v751
    %781 = vmatpush.msra.mxu0 %v750
    %782 = vmatmul.f32.gmra.mxu0 %v729
    %v783 = vpop.f32.mrf.mxu0
    %v784 = vadd.f32 0.0, %v783
    %785 = vmatmul.f32.gmra.mxu0 %v732
    %v786 = vpop.f32.mrf.mxu0
    %v787 = vadd.f32 0.0, %v786
    %788 = vmatmul.f32.gmra.mxu0 %v735
    %v789 = vpop.f32.mrf.mxu0
    %v790 = vadd.f32 0.0, %v789
    %791 = vmatmul.f32.gmra.mxu0 %v738
    %v792 = vpop.f32.mrf.mxu0
    %v793 = vadd.f32 0.0, %v792
    %794 = vmatmul.f32.gmra.mxu0 %v741
    %v795 = vpop.f32.mrf.mxu0
    %v796 = vadd.f32 0.0, %v795
    %797 = vmatmul.f32.gmra.mxu0 %v744
    %v798 = vpop.f32.mrf.mxu0
    %v799 = vadd.f32 0.0, %v798
    %800 = vmatmul.f32.gmra.mxu0 %v747
    %v801 = vpop.f32.mrf.mxu0
    %v802 = vadd.f32 0.0, %v801
    %803 = vdwg.mxu0
    %v804 = vadd.f32 %v651, %v784
    %v805 = vadd.f32 %v652, %v787
    %v806 = vadd.f32 %v653, %v790
    %v807 = vadd.f32 %v654, %v793
    %v808 = vadd.f32 %v655, %v796
    %v809 = vadd.f32 %v656, %v799
    %v810 = vadd.f32 %v657, %v802
    %s811 = scalar_lea.vmem %s1, 560
    %v812 = vld [vmem:[%s811] sm:$0xff]
    %v813 = vld [vmem:[%s811 + $0x8] sm:$0xff]
    %v814 = vld [vmem:[%s811 + $0x10] sm:$0xff]
    %v815 = vld [vmem:[%s811 + $0x18] sm:$0xff]
    %v816 = vld [vmem:[%s811 + $0x20] sm:$0xff]
    %v817 = vld [vmem:[%s811 + $0x28] sm:$0xff]
    %v818 = vld [vmem:[%s811 + $0x30] sm:$0xff]
    %v819 = vld [vmem:[%s811 + $0x38] sm:$0xff]
    %v820 = vld [vmem:[%s811 + $0x40] sm:$0xff]
    %v821 = vld [vmem:[%s811 + $0x48] sm:$0xff]
    %v822 = vld [vmem:[%s811 + $0x50] sm:$0xff]
    %v823 = vld [vmem:[%s811 + $0x58] sm:$0xff]
    %v824 = vld [vmem:[%s811 + $0x60] sm:$0xff]
    %v825 = vld [vmem:[%s811 + $0x68] sm:$0xff]
    %826 = vmatpush.msra.mxu0 %v45
    %827 = vmatpush.msra.mxu0 %v44
    %828 = vmatpush.msra.mxu0 %v43
    %829 = vmatpush.msra.mxu0 %v42
    %830 = vmatpush.msra.mxu0 %v41
    %831 = vmatpush.msra.mxu0 %v40
    %832 = vmatpush.msra.mxu0 %v39
    %833 = vmatpush.msra.mxu0 %v38
    %834 = vmatpush.msra.mxu0 %v37
    %835 = vmatpush.msra.mxu0 %v36
    %836 = vmatpush.msra.mxu0 %v35
    %837 = vmatpush.msra.mxu0 %v34
    %838 = vmatpush.msra.mxu0 %v33
    %839 = vmatpush.msra.mxu0 %v32
    %840 = vmatpush.msra.mxu0 %v31
    %841 = vmatpush.msra.mxu0 %v30
    %842 = vmatmul.f32.gmra.mxu0 %v812
    %v843 = vpop.f32.mrf.mxu0
    %v844 = vadd.f32 0.0, %v843
    %845 = vmatmul.f32.gmra.mxu0 %v814
    %v846 = vpop.f32.mrf.mxu0
    %v847 = vadd.f32 0.0, %v846
    %848 = vmatmul.f32.gmra.mxu0 %v816
    %v849 = vpop.f32.mrf.mxu0
    %v850 = vadd.f32 0.0, %v849
    %851 = vmatmul.f32.gmra.mxu0 %v818
    %v852 = vpop.f32.mrf.mxu0
    %v853 = vadd.f32 0.0, %v852
    %854 = vmatmul.f32.gmra.mxu0 %v820
    %v855 = vpop.f32.mrf.mxu0
    %v856 = vadd.f32 0.0, %v855
    %857 = vmatmul.f32.gmra.mxu0 %v822
    %v858 = vpop.f32.mrf.mxu0
    %v859 = vadd.f32 0.0, %v858
    %860 = vmatmul.f32.gmra.mxu0 %v824
    %v861 = vpop.f32.mrf.mxu0
    %v862 = vadd.f32 0.0, %v861
    %863 = vdwg.mxu0
    %864 = vmatpush.msra.mxu0 %v61
    %865 = vmatpush.msra.mxu0 %v60
    %866 = vmatpush.msra.mxu0 %v59
    %867 = vmatpush.msra.mxu0 %v58
    %868 = vmatpush.msra.mxu0 %v57
    %869 = vmatpush.msra.mxu0 %v56
    %870 = vmatpush.msra.mxu0 %v55
    %871 = vmatpush.msra.mxu0 %v54
    %872 = vmatpush.msra.mxu0 %v53
    %873 = vmatpush.msra.mxu0 %v52
    %874 = vmatpush.msra.mxu0 %v51
    %875 = vmatpush.msra.mxu0 %v50
    %876 = vmatpush.msra.mxu0 %v49
    %877 = vmatpush.msra.mxu0 %v48
    %878 = vmatpush.msra.mxu0 %v47
    %879 = vmatpush.msra.mxu0 %v46
    %880 = vmatmul.f32.gmra.mxu0 %v813
    %v881 = vpop.f32.mrf.mxu0
    %v882 = vadd.f32 %v844, %v881
    %883 = vmatmul.f32.gmra.mxu0 %v815
    %v884 = vpop.f32.mrf.mxu0
    %v885 = vadd.f32 %v847, %v884
    %886 = vmatmul.f32.gmra.mxu0 %v817
    %v887 = vpop.f32.mrf.mxu0
    %v888 = vadd.f32 %v850, %v887
    %889 = vmatmul.f32.gmra.mxu0 %v819
    %v890 = vpop.f32.mrf.mxu0
    %v891 = vadd.f32 %v853, %v890
    %892 = vmatmul.f32.gmra.mxu0 %v821
    %v893 = vpop.f32.mrf.mxu0
    %v894 = vadd.f32 %v856, %v893
    %895 = vmatmul.f32.gmra.mxu0 %v823
    %v896 = vpop.f32.mrf.mxu0
    %v897 = vadd.f32 %v859, %v896
    %898 = vmatmul.f32.gmra.mxu0 %v825
    %v899 = vpop.f32.mrf.mxu0
    %v900 = vadd.f32 %v862, %v899
    %901 = vdwg.mxu0
    %s902 = scalar_lea.vmem %s2, 640
    %v903 = vld [vmem:[%s902] sm:$0xff]
    %v904 = vld [vmem:[%s902 + $0x8] sm:$0xff]
    %v905 = vld [vmem:[%s902 + $0x10] sm:$0xff]
    %v906 = vld [vmem:[%s902 + $0x18] sm:$0xff]
    %v907 = vld [vmem:[%s902 + $0x20] sm:$0xff]
    %v908 = vld [vmem:[%s902 + $0x28] sm:$0xff]
    %v909 = vld [vmem:[%s902 + $0x30] sm:$0xff]
    %v910 = vld [vmem:[%s902 + $0x38] sm:$0xff]
    %v911 = vld [vmem:[%s902 + $0x40] sm:$0xff]
    %v912 = vld [vmem:[%s902 + $0x48] sm:$0xff]
    %v913 = vld [vmem:[%s902 + $0x50] sm:$0xff]
    %v914 = vld [vmem:[%s902 + $0x58] sm:$0xff]
    %v915 = vld [vmem:[%s902 + $0x60] sm:$0xff]
    %v916 = vld [vmem:[%s902 + $0x68] sm:$0xff]
    %v917 = vld [vmem:[%s902 + $0x70] sm:$0xff]
    %v918 = vld [vmem:[%s902 + $0x78] sm:$0xff]
    %919 = vmatpush.msra.mxu0 %v918
    %920 = vmatpush.msra.mxu0 %v917
    %921 = vmatpush.msra.mxu0 %v916
    %922 = vmatpush.msra.mxu0 %v915
    %923 = vmatpush.msra.mxu0 %v914
    %924 = vmatpush.msra.mxu0 %v913
    %925 = vmatpush.msra.mxu0 %v912
    %926 = vmatpush.msra.mxu0 %v911
    %927 = vmatpush.msra.mxu0 %v910
    %928 = vmatpush.msra.mxu0 %v909
    %929 = vmatpush.msra.mxu0 %v908
    %930 = vmatpush.msra.mxu0 %v907
    %931 = vmatpush.msra.mxu0 %v906
    %932 = vmatpush.msra.mxu0 %v905
    %933 = vmatpush.msra.mxu0 %v904
    %934 = vmatpush.msra.mxu0 %v903
    %935 = vmatmul.f32.gmra.mxu0 %v882
    %v936 = vpop.f32.mrf.mxu0
    %v937 = vadd.f32 0.0, %v936
    %938 = vmatmul.f32.gmra.mxu0 %v885
    %v939 = vpop.f32.mrf.mxu0
    %v940 = vadd.f32 0.0, %v939
    %941 = vmatmul.f32.gmra.mxu0 %v888
    %v942 = vpop.f32.mrf.mxu0
    %v943 = vadd.f32 0.0, %v942
    %944 = vmatmul.f32.gmra.mxu0 %v891
    %v945 = vpop.f32.mrf.mxu0
    %v946 = vadd.f32 0.0, %v945
    %947 = vmatmul.f32.gmra.mxu0 %v894
    %v948 = vpop.f32.mrf.mxu0
    %v949 = vadd.f32 0.0, %v948
    %950 = vmatmul.f32.gmra.mxu0 %v897
    %v951 = vpop.f32.mrf.mxu0
    %v952 = vadd.f32 0.0, %v951
    %953 = vmatmul.f32.gmra.mxu0 %v900
    %v954 = vpop.f32.mrf.mxu0
    %v955 = vadd.f32 0.0, %v954
    %956 = vdwg.mxu0
    %v957 = vadd.f32 %v804, %v937
    %v958 = vadd.f32 %v805, %v940
    %v959 = vadd.f32 %v806, %v943
    %v960 = vadd.f32 %v807, %v946
    %v961 = vadd.f32 %v808, %v949
    %v962 = vadd.f32 %v809, %v952
    %v963 = vadd.f32 %v810, %v955
    %s964 = scalar_lea.vmem %s1, 672
    %v965 = vld [vmem:[%s964] sm:$0xff]
    %v966 = vld [vmem:[%s964 + $0x8] sm:$0xff]
    %v967 = vld [vmem:[%s964 + $0x10] sm:$0xff]
    %v968 = vld [vmem:[%s964 + $0x18] sm:$0xff]
    %v969 = vld [vmem:[%s964 + $0x20] sm:$0xff]
    %v970 = vld [vmem:[%s964 + $0x28] sm:$0xff]
    %v971 = vld [vmem:[%s964 + $0x30] sm:$0xff]
    %v972 = vld [vmem:[%s964 + $0x38] sm:$0xff]
    %v973 = vld [vmem:[%s964 + $0x40] sm:$0xff]
    %v974 = vld [vmem:[%s964 + $0x48] sm:$0xff]
    %v975 = vld [vmem:[%s964 + $0x50] sm:$0xff]
    %v976 = vld [vmem:[%s964 + $0x58] sm:$0xff]
    %v977 = vld [vmem:[%s964 + $0x60] sm:$0xff]
    %v978 = vld [vmem:[%s964 + $0x68] sm:$0xff]
    %979 = vmatpush.msra.mxu0 %v45
    %980 = vmatpush.msra.mxu0 %v44
    %981 = vmatpush.msra.mxu0 %v43
    %982 = vmatpush.msra.mxu0 %v42
    %983 = vmatpush.msra.mxu0 %v41
    %984 = vmatpush.msra.mxu0 %v40
    %985 = vmatpush.msra.mxu0 %v39
    %986 = vmatpush.msra.mxu0 %v38
    %987 = vmatpush.msra.mxu0 %v37
    %988 = vmatpush.msra.mxu0 %v36
    %989 = vmatpush.msra.mxu0 %v35
    %990 = vmatpush.msra.mxu0 %v34
    %991 = vmatpush.msra.mxu0 %v33
    %992 = vmatpush.msra.mxu0 %v32
    %993 = vmatpush.msra.mxu0 %v31
    %994 = vmatpush.msra.mxu0 %v30
    %995 = vmatmul.f32.gmra.mxu0 %v965
    %v996 = vpop.f32.mrf.mxu0
    %v997 = vadd.f32 0.0, %v996
    %998 = vmatmul.f32.gmra.mxu0 %v967
    %v999 = vpop.f32.mrf.mxu0
    %v1000 = vadd.f32 0.0, %v999
    %1001 = vmatmul.f32.gmra.mxu0 %v969
    %v1002 = vpop.f32.mrf.mxu0
    %v1003 = vadd.f32 0.0, %v1002
    %1004 = vmatmul.f32.gmra.mxu0 %v971
    %v1005 = vpop.f32.mrf.mxu0
    %v1006 = vadd.f32 0.0, %v1005
    %1007 = vmatmul.f32.gmra.mxu0 %v973
    %v1008 = vpop.f32.mrf.mxu0
    %v1009 = vadd.f32 0.0, %v1008
    %1010 = vmatmul.f32.gmra.mxu0 %v975
    %v1011 = vpop.f32.mrf.mxu0
    %v1012 = vadd.f32 0.0, %v1011
    %1013 = vmatmul.f32.gmra.mxu0 %v977
    %v1014 = vpop.f32.mrf.mxu0
    %v1015 = vadd.f32 0.0, %v1014
    %1016 = vdwg.mxu0
    %1017 = vmatpush.msra.mxu0 %v61
    %1018 = vmatpush.msra.mxu0 %v60
    %1019 = vmatpush.msra.mxu0 %v59
    %1020 = vmatpush.msra.mxu0 %v58
    %1021 = vmatpush.msra.mxu0 %v57
    %1022 = vmatpush.msra.mxu0 %v56
    %1023 = vmatpush.msra.mxu0 %v55
    %1024 = vmatpush.msra.mxu0 %v54
    %1025 = vmatpush.msra.mxu0 %v53
    %1026 = vmatpush.msra.mxu0 %v52
    %1027 = vmatpush.msra.mxu0 %v51
    %1028 = vmatpush.msra.mxu0 %v50
    %1029 = vmatpush.msra.mxu0 %v49
    %1030 = vmatpush.msra.mxu0 %v48
    %1031 = vmatpush.msra.mxu0 %v47
    %1032 = vmatpush.msra.mxu0 %v46
    %1033 = vmatmul.f32.gmra.mxu0 %v966
    %v1034 = vpop.f32.mrf.mxu0
    %v1035 = vadd.f32 %v997, %v1034
    %1036 = vmatmul.f32.gmra.mxu0 %v968
    %v1037 = vpop.f32.mrf.mxu0
    %v1038 = vadd.f32 %v1000, %v1037
    %1039 = vmatmul.f32.gmra.mxu0 %v970
    %v1040 = vpop.f32.mrf.mxu0
    %v1041 = vadd.f32 %v1003, %v1040
    %1042 = vmatmul.f32.gmra.mxu0 %v972
    %v1043 = vpop.f32.mrf.mxu0
    %v1044 = vadd.f32 %v1006, %v1043
    %1045 = vmatmul.f32.gmra.mxu0 %v974
    %v1046 = vpop.f32.mrf.mxu0
    %v1047 = vadd.f32 %v1009, %v1046
    %1048 = vmatmul.f32.gmra.mxu0 %v976
    %v1049 = vpop.f32.mrf.mxu0
    %v1050 = vadd.f32 %v1012, %v1049
    %1051 = vmatmul.f32.gmra.mxu0 %v978
    %v1052 = vpop.f32.mrf.mxu0
    %v1053 = vadd.f32 %v1015, %v1052
    %1054 = vdwg.mxu0
    %s1055 = scalar_lea.vmem %s2, 768
    %v1056 = vld [vmem:[%s1055] sm:$0xff]
    %v1057 = vld [vmem:[%s1055 + $0x8] sm:$0xff]
    %v1058 = vld [vmem:[%s1055 + $0x10] sm:$0xff]
    %v1059 = vld [vmem:[%s1055 + $0x18] sm:$0xff]
    %v1060 = vld [vmem:[%s1055 + $0x20] sm:$0xff]
    %v1061 = vld [vmem:[%s1055 + $0x28] sm:$0xff]
    %v1062 = vld [vmem:[%s1055 + $0x30] sm:$0xff]
    %v1063 = vld [vmem:[%s1055 + $0x38] sm:$0xff]
    %v1064 = vld [vmem:[%s1055 + $0x40] sm:$0xff]
    %v1065 = vld [vmem:[%s1055 + $0x48] sm:$0xff]
    %v1066 = vld [vmem:[%s1055 + $0x50] sm:$0xff]
    %v1067 = vld [vmem:[%s1055 + $0x58] sm:$0xff]
    %v1068 = vld [vmem:[%s1055 + $0x60] sm:$0xff]
    %v1069 = vld [vmem:[%s1055 + $0x68] sm:$0xff]
    %v1070 = vld [vmem:[%s1055 + $0x70] sm:$0xff]
    %v1071 = vld [vmem:[%s1055 + $0x78] sm:$0xff]
    %1072 = vmatpush.msra.mxu0 %v1071
    %1073 = vmatpush.msra.mxu0 %v1070
    %1074 = vmatpush.msra.mxu0 %v1069
    %1075 = vmatpush.msra.mxu0 %v1068
    %1076 = vmatpush.msra.mxu0 %v1067
    %1077 = vmatpush.msra.mxu0 %v1066
    %1078 = vmatpush.msra.mxu0 %v1065
    %1079 = vmatpush.msra.mxu0 %v1064
    %1080 = vmatpush.msra.mxu0 %v1063
    %1081 = vmatpush.msra.mxu0 %v1062
    %1082 = vmatpush.msra.mxu0 %v1061
    %1083 = vmatpush.msra.mxu0 %v1060
    %1084 = vmatpush.msra.mxu0 %v1059
    %1085 = vmatpush.msra.mxu0 %v1058
    %1086 = vmatpush.msra.mxu0 %v1057
    %1087 = vmatpush.msra.mxu0 %v1056
    %1088 = vmatmul.f32.gmra.mxu0 %v1035
    %v1089 = vpop.f32.mrf.mxu0
    %v1090 = vadd.f32 0.0, %v1089
    %1091 = vmatmul.f32.gmra.mxu0 %v1038
    %v1092 = vpop.f32.mrf.mxu0
    %v1093 = vadd.f32 0.0, %v1092
    %1094 = vmatmul.f32.gmra.mxu0 %v1041
    %v1095 = vpop.f32.mrf.mxu0
    %v1096 = vadd.f32 0.0, %v1095
    %1097 = vmatmul.f32.gmra.mxu0 %v1044
    %v1098 = vpop.f32.mrf.mxu0
    %v1099 = vadd.f32 0.0, %v1098
    %1100 = vmatmul.f32.gmra.mxu0 %v1047
    %v1101 = vpop.f32.mrf.mxu0
    %v1102 = vadd.f32 0.0, %v1101
    %1103 = vmatmul.f32.gmra.mxu0 %v1050
    %v1104 = vpop.f32.mrf.mxu0
    %v1105 = vadd.f32 0.0, %v1104
    %1106 = vmatmul.f32.gmra.mxu0 %v1053
    %v1107 = vpop.f32.mrf.mxu0
    %v1108 = vadd.f32 0.0, %v1107
    %1109 = vdwg.mxu0
    %v1110 = vadd.f32 %v957, %v1090
    %v1111 = vadd.f32 %v958, %v1093
    %v1112 = vadd.f32 %v959, %v1096
    %v1113 = vadd.f32 %v960, %v1099
    %v1114 = vadd.f32 %v961, %v1102
    %v1115 = vadd.f32 %v962, %v1105
    %v1116 = vadd.f32 %v963, %v1108
    %s1117 = scalar_lea.vmem %s1, 784
    %v1118 = vld [vmem:[%s1117] sm:$0xff]
    %v1119 = vld [vmem:[%s1117 + $0x8] sm:$0xff]
    %v1120 = vld [vmem:[%s1117 + $0x10] sm:$0xff]
    %v1121 = vld [vmem:[%s1117 + $0x18] sm:$0xff]
    %v1122 = vld [vmem:[%s1117 + $0x20] sm:$0xff]
    %v1123 = vld [vmem:[%s1117 + $0x28] sm:$0xff]
    %v1124 = vld [vmem:[%s1117 + $0x30] sm:$0xff]
    %v1125 = vld [vmem:[%s1117 + $0x38] sm:$0xff]
    %v1126 = vld [vmem:[%s1117 + $0x40] sm:$0xff]
    %v1127 = vld [vmem:[%s1117 + $0x48] sm:$0xff]
    %v1128 = vld [vmem:[%s1117 + $0x50] sm:$0xff]
    %v1129 = vld [vmem:[%s1117 + $0x58] sm:$0xff]
    %v1130 = vld [vmem:[%s1117 + $0x60] sm:$0xff]
    %v1131 = vld [vmem:[%s1117 + $0x68] sm:$0xff]
    %1132 = vmatpush.msra.mxu0 %v45
    %1133 = vmatpush.msra.mxu0 %v44
    %1134 = vmatpush.msra.mxu0 %v43
    %1135 = vmatpush.msra.mxu0 %v42
    %1136 = vmatpush.msra.mxu0 %v41
    %1137 = vmatpush.msra.mxu0 %v40
    %1138 = vmatpush.msra.mxu0 %v39
    %1139 = vmatpush.msra.mxu0 %v38
    %1140 = vmatpush.msra.mxu0 %v37
    %1141 = vmatpush.msra.mxu0 %v36
    %1142 = vmatpush.msra.mxu0 %v35
    %1143 = vmatpush.msra.mxu0 %v34
    %1144 = vmatpush.msra.mxu0 %v33
    %1145 = vmatpush.msra.mxu0 %v32
    %1146 = vmatpush.msra.mxu0 %v31
    %1147 = vmatpush.msra.mxu0 %v30
    %1148 = vmatmul.f32.gmra.mxu0 %v1118
    %v1149 = vpop.f32.mrf.mxu0
    %v1150 = vadd.f32 0.0, %v1149
    %1151 = vmatmul.f32.gmra.mxu0 %v1120
    %v1152 = vpop.f32.mrf.mxu0
    %v1153 = vadd.f32 0.0, %v1152
    %1154 = vmatmul.f32.gmra.mxu0 %v1122
    %v1155 = vpop.f32.mrf.mxu0
    %v1156 = vadd.f32 0.0, %v1155
    %1157 = vmatmul.f32.gmra.mxu0 %v1124
    %v1158 = vpop.f32.mrf.mxu0
    %v1159 = vadd.f32 0.0, %v1158
    %1160 = vmatmul.f32.gmra.mxu0 %v1126
    %v1161 = vpop.f32.mrf.mxu0
    %v1162 = vadd.f32 0.0, %v1161
    %1163 = vmatmul.f32.gmra.mxu0 %v1128
    %v1164 = vpop.f32.mrf.mxu0
    %v1165 = vadd.f32 0.0, %v1164
    %1166 = vmatmul.f32.gmra.mxu0 %v1130
    %v1167 = vpop.f32.mrf.mxu0
    %v1168 = vadd.f32 0.0, %v1167
    %1169 = vdwg.mxu0
    %1170 = vmatpush.msra.mxu0 %v61
    %1171 = vmatpush.msra.mxu0 %v60
    %1172 = vmatpush.msra.mxu0 %v59
    %1173 = vmatpush.msra.mxu0 %v58
    %1174 = vmatpush.msra.mxu0 %v57
    %1175 = vmatpush.msra.mxu0 %v56
    %1176 = vmatpush.msra.mxu0 %v55
    %1177 = vmatpush.msra.mxu0 %v54
    %1178 = vmatpush.msra.mxu0 %v53
    %1179 = vmatpush.msra.mxu0 %v52
    %1180 = vmatpush.msra.mxu0 %v51
    %1181 = vmatpush.msra.mxu0 %v50
    %1182 = vmatpush.msra.mxu0 %v49
    %1183 = vmatpush.msra.mxu0 %v48
    %1184 = vmatpush.msra.mxu0 %v47
    %1185 = vmatpush.msra.mxu0 %v46
    %1186 = vmatmul.f32.gmra.mxu0 %v1119
    %v1187 = vpop.f32.mrf.mxu0
    %v1188 = vadd.f32 %v1150, %v1187
    %1189 = vmatmul.f32.gmra.mxu0 %v1121
    %v1190 = vpop.f32.mrf.mxu0
    %v1191 = vadd.f32 %v1153, %v1190
    %1192 = vmatmul.f32.gmra.mxu0 %v1123
    %v1193 = vpop.f32.mrf.mxu0
    %v1194 = vadd.f32 %v1156, %v1193
    %1195 = vmatmul.f32.gmra.mxu0 %v1125
    %v1196 = vpop.f32.mrf.mxu0
    %v1197 = vadd.f32 %v1159, %v1196
    %1198 = vmatmul.f32.gmra.mxu0 %v1127
    %v1199 = vpop.f32.mrf.mxu0
    %v1200 = vadd.f32 %v1162, %v1199
    %1201 = vmatmul.f32.gmra.mxu0 %v1129
    %v1202 = vpop.f32.mrf.mxu0
    %v1203 = vadd.f32 %v1165, %v1202
    %1204 = vmatmul.f32.gmra.mxu0 %v1131
    %v1205 = vpop.f32.mrf.mxu0
    %v1206 = vadd.f32 %v1168, %v1205
    %1207 = vdwg.mxu0
    %s1208 = scalar_lea.vmem %s2, 896
    %v1209 = vld [vmem:[%s1208] sm:$0xff]
    %v1210 = vld [vmem:[%s1208 + $0x8] sm:$0xff]
    %v1211 = vld [vmem:[%s1208 + $0x10] sm:$0xff]
    %v1212 = vld [vmem:[%s1208 + $0x18] sm:$0xff]
    %v1213 = vld [vmem:[%s1208 + $0x20] sm:$0xff]
    %v1214 = vld [vmem:[%s1208 + $0x28] sm:$0xff]
    %v1215 = vld [vmem:[%s1208 + $0x30] sm:$0xff]
    %v1216 = vld [vmem:[%s1208 + $0x38] sm:$0xff]
    %v1217 = vld [vmem:[%s1208 + $0x40] sm:$0xff]
    %v1218 = vld [vmem:[%s1208 + $0x48] sm:$0xff]
    %v1219 = vld [vmem:[%s1208 + $0x50] sm:$0xff]
    %v1220 = vld [vmem:[%s1208 + $0x58] sm:$0xff]
    %v1221 = vld [vmem:[%s1208 + $0x60] sm:$0xff]
    %v1222 = vld [vmem:[%s1208 + $0x68] sm:$0xff]
    %v1223 = vld [vmem:[%s1208 + $0x70] sm:$0xff]
    %v1224 = vld [vmem:[%s1208 + $0x78] sm:$0xff]
    %1225 = vmatpush.msra.mxu0 %v1224
    %1226 = vmatpush.msra.mxu0 %v1223
    %1227 = vmatpush.msra.mxu0 %v1222
    %1228 = vmatpush.msra.mxu0 %v1221
    %1229 = vmatpush.msra.mxu0 %v1220
    %1230 = vmatpush.msra.mxu0 %v1219
    %1231 = vmatpush.msra.mxu0 %v1218
    %1232 = vmatpush.msra.mxu0 %v1217
    %1233 = vmatpush.msra.mxu0 %v1216
    %1234 = vmatpush.msra.mxu0 %v1215
    %1235 = vmatpush.msra.mxu0 %v1214
    %1236 = vmatpush.msra.mxu0 %v1213
    %1237 = vmatpush.msra.mxu0 %v1212
    %1238 = vmatpush.msra.mxu0 %v1211
    %1239 = vmatpush.msra.mxu0 %v1210
    %1240 = vmatpush.msra.mxu0 %v1209
    %1241 = vmatmul.f32.gmra.mxu0 %v1188
    %v1242 = vpop.f32.mrf.mxu0
    %v1243 = vadd.f32 0.0, %v1242
    %1244 = vmatmul.f32.gmra.mxu0 %v1191
    %v1245 = vpop.f32.mrf.mxu0
    %v1246 = vadd.f32 0.0, %v1245
    %1247 = vmatmul.f32.gmra.mxu0 %v1194
    %v1248 = vpop.f32.mrf.mxu0
    %v1249 = vadd.f32 0.0, %v1248
    %1250 = vmatmul.f32.gmra.mxu0 %v1197
    %v1251 = vpop.f32.mrf.mxu0
    %v1252 = vadd.f32 0.0, %v1251
    %1253 = vmatmul.f32.gmra.mxu0 %v1200
    %v1254 = vpop.f32.mrf.mxu0
    %v1255 = vadd.f32 0.0, %v1254
    %1256 = vmatmul.f32.gmra.mxu0 %v1203
    %v1257 = vpop.f32.mrf.mxu0
    %v1258 = vadd.f32 0.0, %v1257
    %1259 = vmatmul.f32.gmra.mxu0 %v1206
    %v1260 = vpop.f32.mrf.mxu0
    %v1261 = vadd.f32 0.0, %v1260
    %1262 = vdwg.mxu0
    %v1263 = vadd.f32 %v1110, %v1243
    %v1264 = vadd.f32 %v1111, %v1246
    %v1265 = vadd.f32 %v1112, %v1249
    %v1266 = vadd.f32 %v1113, %v1252
    %v1267 = vadd.f32 %v1114, %v1255
    %v1268 = vadd.f32 %v1115, %v1258
    %v1269 = vadd.f32 %v1116, %v1261
    %s1270 = scalar_lea.vmem %s1, 896
    %v1271 = vld [vmem:[%s1270] sm:$0xff]
    %v1272 = vld [vmem:[%s1270 + $0x8] sm:$0xff]
    %v1273 = vld [vmem:[%s1270 + $0x10] sm:$0xff]
    %v1274 = vld [vmem:[%s1270 + $0x18] sm:$0xff]
    %v1275 = vld [vmem:[%s1270 + $0x20] sm:$0xff]
    %v1276 = vld [vmem:[%s1270 + $0x28] sm:$0xff]
    %v1277 = vld [vmem:[%s1270 + $0x30] sm:$0xff]
    %v1278 = vld [vmem:[%s1270 + $0x38] sm:$0xff]
    %v1279 = vld [vmem:[%s1270 + $0x40] sm:$0xff]
    %v1280 = vld [vmem:[%s1270 + $0x48] sm:$0xff]
    %v1281 = vld [vmem:[%s1270 + $0x50] sm:$0xff]
    %v1282 = vld [vmem:[%s1270 + $0x58] sm:$0xff]
    %v1283 = vld [vmem:[%s1270 + $0x60] sm:$0xff]
    %v1284 = vld [vmem:[%s1270 + $0x68] sm:$0xff]
    %1285 = vmatpush.msra.mxu0 %v45
    %1286 = vmatpush.msra.mxu0 %v44
    %1287 = vmatpush.msra.mxu0 %v43
    %1288 = vmatpush.msra.mxu0 %v42
    %1289 = vmatpush.msra.mxu0 %v41
    %1290 = vmatpush.msra.mxu0 %v40
    %1291 = vmatpush.msra.mxu0 %v39
    %1292 = vmatpush.msra.mxu0 %v38
    %1293 = vmatpush.msra.mxu0 %v37
    %1294 = vmatpush.msra.mxu0 %v36
    %1295 = vmatpush.msra.mxu0 %v35
    %1296 = vmatpush.msra.mxu0 %v34
    %1297 = vmatpush.msra.mxu0 %v33
    %1298 = vmatpush.msra.mxu0 %v32
    %1299 = vmatpush.msra.mxu0 %v31
    %1300 = vmatpush.msra.mxu0 %v30
    %1301 = vmatmul.f32.gmra.mxu0 %v1271
    %v1302 = vpop.f32.mrf.mxu0
    %v1303 = vadd.f32 0.0, %v1302
    %1304 = vmatmul.f32.gmra.mxu0 %v1273
    %v1305 = vpop.f32.mrf.mxu0
    %v1306 = vadd.f32 0.0, %v1305
    %1307 = vmatmul.f32.gmra.mxu0 %v1275
    %v1308 = vpop.f32.mrf.mxu0
    %v1309 = vadd.f32 0.0, %v1308
    %1310 = vmatmul.f32.gmra.mxu0 %v1277
    %v1311 = vpop.f32.mrf.mxu0
    %v1312 = vadd.f32 0.0, %v1311
    %1313 = vmatmul.f32.gmra.mxu0 %v1279
    %v1314 = vpop.f32.mrf.mxu0
    %v1315 = vadd.f32 0.0, %v1314
    %1316 = vmatmul.f32.gmra.mxu0 %v1281
    %v1317 = vpop.f32.mrf.mxu0
    %v1318 = vadd.f32 0.0, %v1317
    %1319 = vmatmul.f32.gmra.mxu0 %v1283
    %v1320 = vpop.f32.mrf.mxu0
    %v1321 = vadd.f32 0.0, %v1320
    %1322 = vdwg.mxu0
    %1323 = vmatpush.msra.mxu0 %v61
    %1324 = vmatpush.msra.mxu0 %v60
    %1325 = vmatpush.msra.mxu0 %v59
    %1326 = vmatpush.msra.mxu0 %v58
    %1327 = vmatpush.msra.mxu0 %v57
    %1328 = vmatpush.msra.mxu0 %v56
    %1329 = vmatpush.msra.mxu0 %v55
    %1330 = vmatpush.msra.mxu0 %v54
    %1331 = vmatpush.msra.mxu0 %v53
    %1332 = vmatpush.msra.mxu0 %v52
    %1333 = vmatpush.msra.mxu0 %v51
    %1334 = vmatpush.msra.mxu0 %v50
    %1335 = vmatpush.msra.mxu0 %v49
    %1336 = vmatpush.msra.mxu0 %v48
    %1337 = vmatpush.msra.mxu0 %v47
    %1338 = vmatpush.msra.mxu0 %v46
    %1339 = vmatmul.f32.gmra.mxu0 %v1272
    %v1340 = vpop.f32.mrf.mxu0
    %v1341 = vadd.f32 %v1303, %v1340
    %1342 = vmatmul.f32.gmra.mxu0 %v1274
    %v1343 = vpop.f32.mrf.mxu0
    %v1344 = vadd.f32 %v1306, %v1343
    %1345 = vmatmul.f32.gmra.mxu0 %v1276
    %v1346 = vpop.f32.mrf.mxu0
    %v1347 = vadd.f32 %v1309, %v1346
    %1348 = vmatmul.f32.gmra.mxu0 %v1278
    %v1349 = vpop.f32.mrf.mxu0
    %v1350 = vadd.f32 %v1312, %v1349
    %1351 = vmatmul.f32.gmra.mxu0 %v1280
    %v1352 = vpop.f32.mrf.mxu0
    %v1353 = vadd.f32 %v1315, %v1352
    %1354 = vmatmul.f32.gmra.mxu0 %v1282
    %v1355 = vpop.f32.mrf.mxu0
    %v1356 = vadd.f32 %v1318, %v1355
    %1357 = vmatmul.f32.gmra.mxu0 %v1284
    %v1358 = vpop.f32.mrf.mxu0
    %v1359 = vadd.f32 %v1321, %v1358
    %1360 = vdwg.mxu0
    %s1361 = scalar_lea.vmem %s2, 1024
    %v1362 = vld [vmem:[%s1361] sm:$0xff]
    %v1363 = vld [vmem:[%s1361 + $0x8] sm:$0xff]
    %v1364 = vld [vmem:[%s1361 + $0x10] sm:$0xff]
    %v1365 = vld [vmem:[%s1361 + $0x18] sm:$0xff]
    %v1366 = vld [vmem:[%s1361 + $0x20] sm:$0xff]
    %v1367 = vld [vmem:[%s1361 + $0x28] sm:$0xff]
    %v1368 = vld [vmem:[%s1361 + $0x30] sm:$0xff]
    %v1369 = vld [vmem:[%s1361 + $0x38] sm:$0xff]
    %v1370 = vld [vmem:[%s1361 + $0x40] sm:$0xff]
    %v1371 = vld [vmem:[%s1361 + $0x48] sm:$0xff]
    %v1372 = vld [vmem:[%s1361 + $0x50] sm:$0xff]
    %v1373 = vld [vmem:[%s1361 + $0x58] sm:$0xff]
    %v1374 = vld [vmem:[%s1361 + $0x60] sm:$0xff]
    %v1375 = vld [vmem:[%s1361 + $0x68] sm:$0xff]
    %v1376 = vld [vmem:[%s1361 + $0x70] sm:$0xff]
    %v1377 = vld [vmem:[%s1361 + $0x78] sm:$0xff]
    %1378 = vmatpush.msra.mxu0 %v1377
    %1379 = vmatpush.msra.mxu0 %v1376
    %1380 = vmatpush.msra.mxu0 %v1375
    %1381 = vmatpush.msra.mxu0 %v1374
    %1382 = vmatpush.msra.mxu0 %v1373
    %1383 = vmatpush.msra.mxu0 %v1372
    %1384 = vmatpush.msra.mxu0 %v1371
    %1385 = vmatpush.msra.mxu0 %v1370
    %1386 = vmatpush.msra.mxu0 %v1369
    %1387 = vmatpush.msra.mxu0 %v1368
    %1388 = vmatpush.msra.mxu0 %v1367
    %1389 = vmatpush.msra.mxu0 %v1366
    %1390 = vmatpush.msra.mxu0 %v1365
    %1391 = vmatpush.msra.mxu0 %v1364
    %1392 = vmatpush.msra.mxu0 %v1363
    %1393 = vmatpush.msra.mxu0 %v1362
    %1394 = vmatmul.f32.gmra.mxu0 %v1341
    %v1395 = vpop.f32.mrf.mxu0
    %v1396 = vadd.f32 0.0, %v1395
    %1397 = vmatmul.f32.gmra.mxu0 %v1344
    %v1398 = vpop.f32.mrf.mxu0
    %v1399 = vadd.f32 0.0, %v1398
    %1400 = vmatmul.f32.gmra.mxu0 %v1347
    %v1401 = vpop.f32.mrf.mxu0
    %v1402 = vadd.f32 0.0, %v1401
    %1403 = vmatmul.f32.gmra.mxu0 %v1350
    %v1404 = vpop.f32.mrf.mxu0
    %v1405 = vadd.f32 0.0, %v1404
    %1406 = vmatmul.f32.gmra.mxu0 %v1353
    %v1407 = vpop.f32.mrf.mxu0
    %v1408 = vadd.f32 0.0, %v1407
    %1409 = vmatmul.f32.gmra.mxu0 %v1356
    %v1410 = vpop.f32.mrf.mxu0
    %v1411 = vadd.f32 0.0, %v1410
    %1412 = vmatmul.f32.gmra.mxu0 %v1359
    %v1413 = vpop.f32.mrf.mxu0
    %v1414 = vadd.f32 0.0, %v1413
    %1415 = vdwg.mxu0
    %v1416 = vadd.f32 %v1263, %v1396
    %v1417 = vadd.f32 %v1264, %v1399
    %v1418 = vadd.f32 %v1265, %v1402
    %v1419 = vadd.f32 %v1266, %v1405
    %v1420 = vadd.f32 %v1267, %v1408
    %v1421 = vadd.f32 %v1268, %v1411
    %v1422 = vadd.f32 %v1269, %v1414
    %v1423 = vmax.f32 %v1416, 0.0
    %v1424 = vmax.f32 %v1417, 0.0
    %v1425 = vmax.f32 %v1418, 0.0
    %v1426 = vmax.f32 %v1419, 0.0
    %v1427 = vmax.f32 %v1420, 0.0
    %v1428 = vmax.f32 %v1421, 0.0
    %v1429 = vmax.f32 %v1422, 0.0
    %v1430 = vld [vmem:[%s3] sm:$0xff]
    %v1431 = vld [vmem:[%s3 + $0x8] sm:$0xff]
    %vm1432 = vcmask 457728
    %v1434 = vsel %vm1432, %v1430, 0
    %v1437 = vsel %vm1432, %v1431, 0
    %1439 = vmatpush.msra.mxu0 0.0
    %1440 = vmatpush.msra.mxu0 0.0
    %1441 = vmatpush.msra.mxu0 0.0
    %1442 = vmatpush.msra.mxu0 0.0
    %1443 = vmatpush.msra.mxu0 0.0
    %1444 = vmatpush.msra.mxu0 0.0
    %1445 = vmatpush.msra.mxu0 0.0
    %1446 = vmatpush.msra.mxu0 0.0
    %1447 = vmatpush.msra.mxu0 0.0
    %1448 = vmatpush.msra.mxu0 %v1429
    %1449 = vmatpush.msra.mxu0 %v1428
    %1450 = vmatpush.msra.mxu0 %v1427
    %1451 = vmatpush.msra.mxu0 %v1426
    %1452 = vmatpush.msra.mxu0 %v1425
    %1453 = vmatpush.msra.mxu0 %v1424
    %1454 = vmatpush.msra.mxu0 %v1423
    %1455 = vmatmul.f32.gmra.mxu0 %v1434
    %v1456 = vpop.f32.mrf.mxu0
    %v1457 = vadd.f32 0.0, %v1456
    %1458 = vmatmul.f32.gmra.mxu0 %v1437
    %v1459 = vpop.f32.mrf.mxu0
    %v1460 = vadd.f32 0.0, %v1459
    %1461 = vdwg.mxu0
    %v1462 = vld [vmem:[%s4] sm:$0xff]
    %v1463 = vld [vmem:[%s4 + $0x8] sm:$0xff]
    %v1464 = vld [vmem:[%s4 + $0x10] sm:$0xff]
    %v1465 = vld [vmem:[%s4 + $0x18] sm:$0xff]
    %s1466 = scalar_lea.vmem %s3, 16
    %v1467 = vld [vmem:[%s1466] sm:$0xff]
    %v1468 = vld [vmem:[%s1466 + $0x8] sm:$0xff]
    %v1470 = vsel %vm1432, %v1467, 0
    %v1473 = vsel %vm1432, %v1468, 0
    %1475 = vmatpush.msra.mxu0 0.0
    %1476 = vmatpush.msra.mxu0 0.0
    %1477 = vmatpush.msra.mxu0 0.0
    %1478 = vmatpush.msra.mxu0 0.0
    %1479 = vmatpush.msra.mxu0 0.0
    %1480 = vmatpush.msra.mxu0 0.0
    %1481 = vmatpush.msra.mxu0 0.0
    %1482 = vmatpush.msra.mxu0 0.0
    %1483 = vmatpush.msra.mxu0 0.0
    %1484 = vmatpush.msra.mxu0 %v1429
    %1485 = vmatpush.msra.mxu0 %v1428
    %1486 = vmatpush.msra.mxu0 %v1427
    %1487 = vmatpush.msra.mxu0 %v1426
    %1488 = vmatpush.msra.mxu0 %v1425
    %1489 = vmatpush.msra.mxu0 %v1424
    %1490 = vmatpush.msra.mxu0 %v1423
    %1491 = vmatmul.f32.gmra.mxu0 %v1470
    %v1492 = vpop.f32.mrf.mxu0
    %v1493 = vadd.f32 0.0, %v1492
    %1494 = vmatmul.f32.gmra.mxu0 %v1473
    %v1495 = vpop.f32.mrf.mxu0
    %v1496 = vadd.f32 0.0, %v1495
    %1497 = vdwg.mxu0
    %s1498 = scalar_lea.vmem %s4, 32
    %v1499 = vld [vmem:[%s1498] sm:$0xff]
    %v1500 = vld [vmem:[%s1498 + $0x8] sm:$0xff]
    %v1501 = vld [vmem:[%s1498 + $0x10] sm:$0xff]
    %v1502 = vld [vmem:[%s1498 + $0x18] sm:$0xff]
    %vm1503 = vcmask 261120
    %v1505 = vsel %vm1503, %v1493, 0
    %v1508 = vsel %vm1503, %v1496, 0
    %1510 = vmatpush.msra.mxu0 0.0
    %1511 = vmatpush.msra.mxu0 0.0
    %1512 = vmatpush.msra.mxu0 0.0
    %1513 = vmatpush.msra.mxu0 0.0
    %1514 = vmatpush.msra.mxu0 0.0
    %1515 = vmatpush.msra.mxu0 0.0
    %1516 = vmatpush.msra.mxu0 0.0
    %1517 = vmatpush.msra.mxu0 0.0
    %1518 = vmatpush.msra.mxu0 0.0
    %1519 = vmatpush.msra.mxu0 0.0
    %1520 = vmatpush.msra.mxu0 0.0
    %1521 = vmatpush.msra.mxu0 0.0
    %1522 = vmatpush.msra.mxu0 %v1502
    %1523 = vmatpush.msra.mxu0 %v1501
    %1524 = vmatpush.msra.mxu0 %v1500
    %1525 = vmatpush.msra.mxu0 %v1499
    %1526 = vmatmul.f32.gmra.mxu0 %v1505
    %v1527 = vpop.f32.mrf.mxu0
    %v1528 = vadd.f32 0.0, %v1527
    %1529 = vmatmul.f32.gmra.mxu0 %v1508
    %v1530 = vpop.f32.mrf.mxu0
    %v1531 = vadd.f32 0.0, %v1530
    %1532 = vdwg.mxu0
    %v1534 = vsel %vm1503, %v1457, 0
    %v1537 = vsel %vm1503, %v1460, 0
    %1539 = vmatpush.msra.mxu0 0.0
    %1540 = vmatpush.msra.mxu0 0.0
    %1541 = vmatpush.msra.mxu0 0.0
    %1542 = vmatpush.msra.mxu0 0.0
    %1543 = vmatpush.msra.mxu0 0.0
    %1544 = vmatpush.msra.mxu0 0.0
    %1545 = vmatpush.msra.mxu0 0.0
    %1546 = vmatpush.msra.mxu0 0.0
    %1547 = vmatpush.msra.mxu0 0.0
    %1548 = vmatpush.msra.mxu0 0.0
    %1549 = vmatpush.msra.mxu0 0.0
    %1550 = vmatpush.msra.mxu0 0.0
    %1551 = vmatpush.msra.mxu0 %v1465
    %1552 = vmatpush.msra.mxu0 %v1464
    %1553 = vmatpush.msra.mxu0 %v1463
    %1554 = vmatpush.msra.mxu0 %v1462
    %1555 = vmatmul.f32.gmra.mxu0 %v1534
    %v1556 = vpop.f32.mrf.mxu0
    %v1557 = vadd.f32 %v1528, %v1556
    %1558 = vmatmul.f32.gmra.mxu0 %v1537
    %v1559 = vpop.f32.mrf.mxu0
    %v1560 = vadd.f32 %v1531, %v1559
    %1561 = vdwg.mxu0
    %s1562 = scalar_lea.vmem %s3, 32
    %v1563 = vld [vmem:[%s1562] sm:$0xff]
    %v1564 = vld [vmem:[%s1562 + $0x8] sm:$0xff]
    %v1566 = vsel %vm1432, %v1563, 0
    %v1569 = vsel %vm1432, %v1564, 0
    %1571 = vmatpush.msra.mxu0 0.0
    %1572 = vmatpush.msra.mxu0 0.0
    %1573 = vmatpush.msra.mxu0 0.0
    %1574 = vmatpush.msra.mxu0 0.0
    %1575 = vmatpush.msra.mxu0 0.0
    %1576 = vmatpush.msra.mxu0 0.0
    %1577 = vmatpush.msra.mxu0 0.0
    %1578 = vmatpush.msra.mxu0 0.0
    %1579 = vmatpush.msra.mxu0 0.0
    %1580 = vmatpush.msra.mxu0 %v1429
    %1581 = vmatpush.msra.mxu0 %v1428
    %1582 = vmatpush.msra.mxu0 %v1427
    %1583 = vmatpush.msra.mxu0 %v1426
    %1584 = vmatpush.msra.mxu0 %v1425
    %1585 = vmatpush.msra.mxu0 %v1424
    %1586 = vmatpush.msra.mxu0 %v1423
    %1587 = vmatmul.f32.gmra.mxu0 %v1566
    %v1588 = vpop.f32.mrf.mxu0
    %v1589 = vadd.f32 0.0, %v1588
    %1590 = vmatmul.f32.gmra.mxu0 %v1569
    %v1591 = vpop.f32.mrf.mxu0
    %v1592 = vadd.f32 0.0, %v1591
    %1593 = vdwg.mxu0
    %s1594 = scalar_lea.vmem %s4, 64
    %v1595 = vld [vmem:[%s1594] sm:$0xff]
    %v1596 = vld [vmem:[%s1594 + $0x8] sm:$0xff]
    %v1597 = vld [vmem:[%s1594 + $0x10] sm:$0xff]
    %v1598 = vld [vmem:[%s1594 + $0x18] sm:$0xff]
    %v1600 = vsel %vm1503, %v1589, 0
    %v1603 = vsel %vm1503, %v1592, 0
    %1605 = vmatpush.msra.mxu0 0.0
    %1606 = vmatpush.msra.mxu0 0.0
    %1607 = vmatpush.msra.mxu0 0.0
    %1608 = vmatpush.msra.mxu0 0.0
    %1609 = vmatpush.msra.mxu0 0.0
    %1610 = vmatpush.msra.mxu0 0.0
    %1611 = vmatpush.msra.mxu0 0.0
    %1612 = vmatpush.msra.mxu0 0.0
    %1613 = vmatpush.msra.mxu0 0.0
    %1614 = vmatpush.msra.mxu0 0.0
    %1615 = vmatpush.msra.mxu0 0.0
    %1616 = vmatpush.msra.mxu0 0.0
    %1617 = vmatpush.msra.mxu0 %v1598
    %1618 = vmatpush.msra.mxu0 %v1597
    %1619 = vmatpush.msra.mxu0 %v1596
    %1620 = vmatpush.msra.mxu0 %v1595
    %1621 = vmatmul.f32.gmra.mxu0 %v1600
    %v1622 = vpop.f32.mrf.mxu0
    %v1623 = vadd.f32 0.0, %v1622
    %1624 = vmatmul.f32.gmra.mxu0 %v1603
    %v1625 = vpop.f32.mrf.mxu0
    %v1626 = vadd.f32 0.0, %v1625
    %1627 = vdwg.mxu0
    %v1628 = vadd.f32 %v1557, %v1623
    %v1629 = vadd.f32 %v1560, %v1626
    %s1630 = scalar_lea.vmem %s3, 48
    %v1631 = vld [vmem:[%s1630] sm:$0xff]
    %v1632 = vld [vmem:[%s1630 + $0x8] sm:$0xff]
    %v1634 = vsel %vm1432, %v1631, 0
    %v1637 = vsel %vm1432, %v1632, 0
    %1639 = vmatpush.msra.mxu0 0.0
    %1640 = vmatpush.msra.mxu0 0.0
    %1641 = vmatpush.msra.mxu0 0.0
    %1642 = vmatpush.msra.mxu0 0.0
    %1643 = vmatpush.msra.mxu0 0.0
    %1644 = vmatpush.msra.mxu0 0.0
    %1645 = vmatpush.msra.mxu0 0.0
    %1646 = vmatpush.msra.mxu0 0.0
    %1647 = vmatpush.msra.mxu0 0.0
    %1648 = vmatpush.msra.mxu0 %v1429
    %1649 = vmatpush.msra.mxu0 %v1428
    %1650 = vmatpush.msra.mxu0 %v1427
    %1651 = vmatpush.msra.mxu0 %v1426
    %1652 = vmatpush.msra.mxu0 %v1425
    %1653 = vmatpush.msra.mxu0 %v1424
    %1654 = vmatpush.msra.mxu0 %v1423
    %1655 = vmatmul.f32.gmra.mxu0 %v1634
    %v1656 = vpop.f32.mrf.mxu0
    %v1657 = vadd.f32 0.0, %v1656
    %1658 = vmatmul.f32.gmra.mxu0 %v1637
    %v1659 = vpop.f32.mrf.mxu0
    %v1660 = vadd.f32 0.0, %v1659
    %1661 = vdwg.mxu0
    %s1662 = scalar_lea.vmem %s4, 96
    %v1663 = vld [vmem:[%s1662] sm:$0xff]
    %v1664 = vld [vmem:[%s1662 + $0x8] sm:$0xff]
    %v1665 = vld [vmem:[%s1662 + $0x10] sm:$0xff]
    %v1666 = vld [vmem:[%s1662 + $0x18] sm:$0xff]
    %v1668 = vsel %vm1503, %v1657, 0
    %v1671 = vsel %vm1503, %v1660, 0
    %1673 = vmatpush.msra.mxu0 0.0
    %1674 = vmatpush.msra.mxu0 0.0
    %1675 = vmatpush.msra.mxu0 0.0
    %1676 = vmatpush.msra.mxu0 0.0
    %1677 = vmatpush.msra.mxu0 0.0
    %1678 = vmatpush.msra.mxu0 0.0
    %1679 = vmatpush.msra.mxu0 0.0
    %1680 = vmatpush.msra.mxu0 0.0
    %1681 = vmatpush.msra.mxu0 0.0
    %1682 = vmatpush.msra.mxu0 0.0
    %1683 = vmatpush.msra.mxu0 0.0
    %1684 = vmatpush.msra.mxu0 0.0
    %1685 = vmatpush.msra.mxu0 %v1666
    %1686 = vmatpush.msra.mxu0 %v1665
    %1687 = vmatpush.msra.mxu0 %v1664
    %1688 = vmatpush.msra.mxu0 %v1663
    %1689 = vmatmul.f32.gmra.mxu0 %v1668
    %v1690 = vpop.f32.mrf.mxu0
    %v1691 = vadd.f32 0.0, %v1690
    %1692 = vmatmul.f32.gmra.mxu0 %v1671
    %v1693 = vpop.f32.mrf.mxu0
    %v1694 = vadd.f32 0.0, %v1693
    %1695 = vdwg.mxu0
    %v1696 = vadd.f32 %v1628, %v1691
    %v1697 = vadd.f32 %v1629, %v1694
    %s1698 = scalar_lea.vmem %s3, 64
    %v1699 = vld [vmem:[%s1698] sm:$0xff]
    %v1700 = vld [vmem:[%s1698 + $0x8] sm:$0xff]
    %v1702 = vsel %vm1432, %v1699, 0
    %v1705 = vsel %vm1432, %v1700, 0
    %1707 = vmatpush.msra.mxu0 0.0
    %1708 = vmatpush.msra.mxu0 0.0
    %1709 = vmatpush.msra.mxu0 0.0
    %1710 = vmatpush.msra.mxu0 0.0
    %1711 = vmatpush.msra.mxu0 0.0
    %1712 = vmatpush.msra.mxu0 0.0
    %1713 = vmatpush.msra.mxu0 0.0
    %1714 = vmatpush.msra.mxu0 0.0
    %1715 = vmatpush.msra.mxu0 0.0
    %1716 = vmatpush.msra.mxu0 %v1429
    %1717 = vmatpush.msra.mxu0 %v1428
    %1718 = vmatpush.msra.mxu0 %v1427
    %1719 = vmatpush.msra.mxu0 %v1426
    %1720 = vmatpush.msra.mxu0 %v1425
    %1721 = vmatpush.msra.mxu0 %v1424
    %1722 = vmatpush.msra.mxu0 %v1423
    %1723 = vmatmul.f32.gmra.mxu0 %v1702
    %v1724 = vpop.f32.mrf.mxu0
    %v1725 = vadd.f32 0.0, %v1724
    %1726 = vmatmul.f32.gmra.mxu0 %v1705
    %v1727 = vpop.f32.mrf.mxu0
    %v1728 = vadd.f32 0.0, %v1727
    %1729 = vdwg.mxu0
    %s1730 = scalar_lea.vmem %s4, 128
    %v1731 = vld [vmem:[%s1730] sm:$0xff]
    %v1732 = vld [vmem:[%s1730 + $0x8] sm:$0xff]
    %v1733 = vld [vmem:[%s1730 + $0x10] sm:$0xff]
    %v1734 = vld [vmem:[%s1730 + $0x18] sm:$0xff]
    %v1736 = vsel %vm1503, %v1725, 0
    %v1739 = vsel %vm1503, %v1728, 0
    %1741 = vmatpush.msra.mxu0 0.0
    %1742 = vmatpush.msra.mxu0 0.0
    %1743 = vmatpush.msra.mxu0 0.0
    %1744 = vmatpush.msra.mxu0 0.0
    %1745 = vmatpush.msra.mxu0 0.0
    %1746 = vmatpush.msra.mxu0 0.0
    %1747 = vmatpush.msra.mxu0 0.0
    %1748 = vmatpush.msra.mxu0 0.0
    %1749 = vmatpush.msra.mxu0 0.0
    %1750 = vmatpush.msra.mxu0 0.0
    %1751 = vmatpush.msra.mxu0 0.0
    %1752 = vmatpush.msra.mxu0 0.0
    %1753 = vmatpush.msra.mxu0 %v1734
    %1754 = vmatpush.msra.mxu0 %v1733
    %1755 = vmatpush.msra.mxu0 %v1732
    %1756 = vmatpush.msra.mxu0 %v1731
    %1757 = vmatmul.f32.gmra.mxu0 %v1736
    %v1758 = vpop.f32.mrf.mxu0
    %v1759 = vadd.f32 0.0, %v1758
    %1760 = vmatmul.f32.gmra.mxu0 %v1739
    %v1761 = vpop.f32.mrf.mxu0
    %v1762 = vadd.f32 0.0, %v1761
    %1763 = vdwg.mxu0
    %v1764 = vadd.f32 %v1696, %v1759
    %v1765 = vadd.f32 %v1697, %v1762
    %s1766 = scalar_lea.vmem %s3, 80
    %v1767 = vld [vmem:[%s1766] sm:$0xff]
    %v1768 = vld [vmem:[%s1766 + $0x8] sm:$0xff]
    %v1770 = vsel %vm1432, %v1767, 0
    %v1773 = vsel %vm1432, %v1768, 0
    %1775 = vmatpush.msra.mxu0 0.0
    %1776 = vmatpush.msra.mxu0 0.0
    %1777 = vmatpush.msra.mxu0 0.0
    %1778 = vmatpush.msra.mxu0 0.0
    %1779 = vmatpush.msra.mxu0 0.0
    %1780 = vmatpush.msra.mxu0 0.0
    %1781 = vmatpush.msra.mxu0 0.0
    %1782 = vmatpush.msra.mxu0 0.0
    %1783 = vmatpush.msra.mxu0 0.0
    %1784 = vmatpush.msra.mxu0 %v1429
    %1785 = vmatpush.msra.mxu0 %v1428
    %1786 = vmatpush.msra.mxu0 %v1427
    %1787 = vmatpush.msra.mxu0 %v1426
    %1788 = vmatpush.msra.mxu0 %v1425
    %1789 = vmatpush.msra.mxu0 %v1424
    %1790 = vmatpush.msra.mxu0 %v1423
    %1791 = vmatmul.f32.gmra.mxu0 %v1770
    %v1792 = vpop.f32.mrf.mxu0
    %v1793 = vadd.f32 0.0, %v1792
    %1794 = vmatmul.f32.gmra.mxu0 %v1773
    %v1795 = vpop.f32.mrf.mxu0
    %v1796 = vadd.f32 0.0, %v1795
    %1797 = vdwg.mxu0
    %s1798 = scalar_lea.vmem %s4, 160
    %v1799 = vld [vmem:[%s1798] sm:$0xff]
    %v1800 = vld [vmem:[%s1798 + $0x8] sm:$0xff]
    %v1801 = vld [vmem:[%s1798 + $0x10] sm:$0xff]
    %v1802 = vld [vmem:[%s1798 + $0x18] sm:$0xff]
    %v1804 = vsel %vm1503, %v1793, 0
    %v1807 = vsel %vm1503, %v1796, 0
    %1809 = vmatpush.msra.mxu0 0.0
    %1810 = vmatpush.msra.mxu0 0.0
    %1811 = vmatpush.msra.mxu0 0.0
    %1812 = vmatpush.msra.mxu0 0.0
    %1813 = vmatpush.msra.mxu0 0.0
    %1814 = vmatpush.msra.mxu0 0.0
    %1815 = vmatpush.msra.mxu0 0.0
    %1816 = vmatpush.msra.mxu0 0.0
    %1817 = vmatpush.msra.mxu0 0.0
    %1818 = vmatpush.msra.mxu0 0.0
    %1819 = vmatpush.msra.mxu0 0.0
    %1820 = vmatpush.msra.mxu0 0.0
    %1821 = vmatpush.msra.mxu0 %v1802
    %1822 = vmatpush.msra.mxu0 %v1801
    %1823 = vmatpush.msra.mxu0 %v1800
    %1824 = vmatpush.msra.mxu0 %v1799
    %1825 = vmatmul.f32.gmra.mxu0 %v1804
    %v1826 = vpop.f32.mrf.mxu0
    %v1827 = vadd.f32 0.0, %v1826
    %1828 = vmatmul.f32.gmra.mxu0 %v1807
    %v1829 = vpop.f32.mrf.mxu0
    %v1830 = vadd.f32 0.0, %v1829
    %1831 = vdwg.mxu0
    %v1832 = vadd.f32 %v1764, %v1827
    %v1833 = vadd.f32 %v1765, %v1830
    %s1834 = scalar_lea.vmem %s3, 96
    %v1835 = vld [vmem:[%s1834] sm:$0xff]
    %v1836 = vld [vmem:[%s1834 + $0x8] sm:$0xff]
    %v1838 = vsel %vm1432, %v1835, 0
    %v1841 = vsel %vm1432, %v1836, 0
    %1843 = vmatpush.msra.mxu0 0.0
    %1844 = vmatpush.msra.mxu0 0.0
    %1845 = vmatpush.msra.mxu0 0.0
    %1846 = vmatpush.msra.mxu0 0.0
    %1847 = vmatpush.msra.mxu0 0.0
    %1848 = vmatpush.msra.mxu0 0.0
    %1849 = vmatpush.msra.mxu0 0.0
    %1850 = vmatpush.msra.mxu0 0.0
    %1851 = vmatpush.msra.mxu0 0.0
    %1852 = vmatpush.msra.mxu0 %v1429
    %1853 = vmatpush.msra.mxu0 %v1428
    %1854 = vmatpush.msra.mxu0 %v1427
    %1855 = vmatpush.msra.mxu0 %v1426
    %1856 = vmatpush.msra.mxu0 %v1425
    %1857 = vmatpush.msra.mxu0 %v1424
    %1858 = vmatpush.msra.mxu0 %v1423
    %1859 = vmatmul.f32.gmra.mxu0 %v1838
    %v1860 = vpop.f32.mrf.mxu0
    %v1861 = vadd.f32 0.0, %v1860
    %1862 = vmatmul.f32.gmra.mxu0 %v1841
    %v1863 = vpop.f32.mrf.mxu0
    %v1864 = vadd.f32 0.0, %v1863
    %1865 = vdwg.mxu0
    %s1866 = scalar_lea.vmem %s4, 192
    %v1867 = vld [vmem:[%s1866] sm:$0xff]
    %v1868 = vld [vmem:[%s1866 + $0x8] sm:$0xff]
    %v1869 = vld [vmem:[%s1866 + $0x10] sm:$0xff]
    %v1870 = vld [vmem:[%s1866 + $0x18] sm:$0xff]
    %v1872 = vsel %vm1503, %v1861, 0
    %v1875 = vsel %vm1503, %v1864, 0
    %1877 = vmatpush.msra.mxu0 0.0
    %1878 = vmatpush.msra.mxu0 0.0
    %1879 = vmatpush.msra.mxu0 0.0
    %1880 = vmatpush.msra.mxu0 0.0
    %1881 = vmatpush.msra.mxu0 0.0
    %1882 = vmatpush.msra.mxu0 0.0
    %1883 = vmatpush.msra.mxu0 0.0
    %1884 = vmatpush.msra.mxu0 0.0
    %1885 = vmatpush.msra.mxu0 0.0
    %1886 = vmatpush.msra.mxu0 0.0
    %1887 = vmatpush.msra.mxu0 0.0
    %1888 = vmatpush.msra.mxu0 0.0
    %1889 = vmatpush.msra.mxu0 %v1870
    %1890 = vmatpush.msra.mxu0 %v1869
    %1891 = vmatpush.msra.mxu0 %v1868
    %1892 = vmatpush.msra.mxu0 %v1867
    %1893 = vmatmul.f32.gmra.mxu0 %v1872
    %v1894 = vpop.f32.mrf.mxu0
    %v1895 = vadd.f32 0.0, %v1894
    %1896 = vmatmul.f32.gmra.mxu0 %v1875
    %v1897 = vpop.f32.mrf.mxu0
    %v1898 = vadd.f32 0.0, %v1897
    %1899 = vdwg.mxu0
    %v1900 = vadd.f32 %v1832, %v1895
    %v1901 = vadd.f32 %v1833, %v1898
    %s1902 = scalar_lea.vmem %s3, 112
    %v1903 = vld [vmem:[%s1902] sm:$0xff]
    %v1904 = vld [vmem:[%s1902 + $0x8] sm:$0xff]
    %v1906 = vsel %vm1432, %v1903, 0
    %v1909 = vsel %vm1432, %v1904, 0
    %1911 = vmatpush.msra.mxu0 0.0
    %1912 = vmatpush.msra.mxu0 0.0
    %1913 = vmatpush.msra.mxu0 0.0
    %1914 = vmatpush.msra.mxu0 0.0
    %1915 = vmatpush.msra.mxu0 0.0
    %1916 = vmatpush.msra.mxu0 0.0
    %1917 = vmatpush.msra.mxu0 0.0
    %1918 = vmatpush.msra.mxu0 0.0
    %1919 = vmatpush.msra.mxu0 0.0
    %1920 = vmatpush.msra.mxu0 %v1429
    %1921 = vmatpush.msra.mxu0 %v1428
    %1922 = vmatpush.msra.mxu0 %v1427
    %1923 = vmatpush.msra.mxu0 %v1426
    %1924 = vmatpush.msra.mxu0 %v1425
    %1925 = vmatpush.msra.mxu0 %v1424
    %1926 = vmatpush.msra.mxu0 %v1423
    %1927 = vmatmul.f32.gmra.mxu0 %v1906
    %v1928 = vpop.f32.mrf.mxu0
    %v1929 = vadd.f32 0.0, %v1928
    %1930 = vmatmul.f32.gmra.mxu0 %v1909
    %v1931 = vpop.f32.mrf.mxu0
    %v1932 = vadd.f32 0.0, %v1931
    %1933 = vdwg.mxu0
    %s1934 = scalar_lea.vmem %s4, 224
    %v1935 = vld [vmem:[%s1934] sm:$0xff]
    %v1936 = vld [vmem:[%s1934 + $0x8] sm:$0xff]
    %v1937 = vld [vmem:[%s1934 + $0x10] sm:$0xff]
    %v1938 = vld [vmem:[%s1934 + $0x18] sm:$0xff]
    %v1940 = vsel %vm1503, %v1929, 0
    %v1943 = vsel %vm1503, %v1932, 0
    %1945 = vmatpush.msra.mxu0 0.0
    %1946 = vmatpush.msra.mxu0 0.0
    %1947 = vmatpush.msra.mxu0 0.0
    %1948 = vmatpush.msra.mxu0 0.0
    %1949 = vmatpush.msra.mxu0 0.0
    %1950 = vmatpush.msra.mxu0 0.0
    %1951 = vmatpush.msra.mxu0 0.0
    %1952 = vmatpush.msra.mxu0 0.0
    %1953 = vmatpush.msra.mxu0 0.0
    %1954 = vmatpush.msra.mxu0 0.0
    %1955 = vmatpush.msra.mxu0 0.0
    %1956 = vmatpush.msra.mxu0 0.0
    %1957 = vmatpush.msra.mxu0 %v1938
    %1958 = vmatpush.msra.mxu0 %v1937
    %1959 = vmatpush.msra.mxu0 %v1936
    %1960 = vmatpush.msra.mxu0 %v1935
    %1961 = vmatmul.f32.gmra.mxu0 %v1940
    %v1962 = vpop.f32.mrf.mxu0
    %v1963 = vadd.f32 0.0, %v1962
    %1964 = vmatmul.f32.gmra.mxu0 %v1943
    %v1965 = vpop.f32.mrf.mxu0
    %v1966 = vadd.f32 0.0, %v1965
    %1967 = vdwg.mxu0
    %v1968 = vadd.f32 %v1900, %v1963
    %v1969 = vadd.f32 %v1901, %v1966
    %s1970 = scalar_lea.vmem %s3, 128
    %v1971 = vld [vmem:[%s1970] sm:$0xff]
    %v1972 = vld [vmem:[%s1970 + $0x8] sm:$0xff]
    %v1974 = vsel %vm1432, %v1971, 0
    %v1977 = vsel %vm1432, %v1972, 0
    %1979 = vmatpush.msra.mxu0 0.0
    %1980 = vmatpush.msra.mxu0 0.0
    %1981 = vmatpush.msra.mxu0 0.0
    %1982 = vmatpush.msra.mxu0 0.0
    %1983 = vmatpush.msra.mxu0 0.0
    %1984 = vmatpush.msra.mxu0 0.0
    %1985 = vmatpush.msra.mxu0 0.0
    %1986 = vmatpush.msra.mxu0 0.0
    %1987 = vmatpush.msra.mxu0 0.0
    %1988 = vmatpush.msra.mxu0 %v1429
    %1989 = vmatpush.msra.mxu0 %v1428
    %1990 = vmatpush.msra.mxu0 %v1427
    %1991 = vmatpush.msra.mxu0 %v1426
    %1992 = vmatpush.msra.mxu0 %v1425
    %1993 = vmatpush.msra.mxu0 %v1424
    %1994 = vmatpush.msra.mxu0 %v1423
    %1995 = vmatmul.f32.gmra.mxu0 %v1974
    %v1996 = vpop.f32.mrf.mxu0
    %v1997 = vadd.f32 0.0, %v1996
    %1998 = vmatmul.f32.gmra.mxu0 %v1977
    %v1999 = vpop.f32.mrf.mxu0
    %v2000 = vadd.f32 0.0, %v1999
    %2001 = vdwg.mxu0
    %s2002 = scalar_lea.vmem %s4, 256
    %v2003 = vld [vmem:[%s2002] sm:$0xff]
    %v2004 = vld [vmem:[%s2002 + $0x8] sm:$0xff]
    %v2005 = vld [vmem:[%s2002 + $0x10] sm:$0xff]
    %v2006 = vld [vmem:[%s2002 + $0x18] sm:$0xff]
    %v2008 = vsel %vm1503, %v1997, 0
    %v2011 = vsel %vm1503, %v2000, 0
    %2013 = vmatpush.msra.mxu0 0.0
    %2014 = vmatpush.msra.mxu0 0.0
    %2015 = vmatpush.msra.mxu0 0.0
    %2016 = vmatpush.msra.mxu0 0.0
    %2017 = vmatpush.msra.mxu0 0.0
    %2018 = vmatpush.msra.mxu0 0.0
    %2019 = vmatpush.msra.mxu0 0.0
    %2020 = vmatpush.msra.mxu0 0.0
    %2021 = vmatpush.msra.mxu0 0.0
    %2022 = vmatpush.msra.mxu0 0.0
    %2023 = vmatpush.msra.mxu0 0.0
    %2024 = vmatpush.msra.mxu0 0.0
    %2025 = vmatpush.msra.mxu0 %v2006
    %2026 = vmatpush.msra.mxu0 %v2005
    %2027 = vmatpush.msra.mxu0 %v2004
    %2028 = vmatpush.msra.mxu0 %v2003
    %2029 = vmatmul.f32.gmra.mxu0 %v2008
    %v2030 = vpop.f32.mrf.mxu0
    %v2031 = vadd.f32 0.0, %v2030
    %2032 = vmatmul.f32.gmra.mxu0 %v2011
    %v2033 = vpop.f32.mrf.mxu0
    %v2034 = vadd.f32 0.0, %v2033
    %2035 = vdwg.mxu0
    %v2036 = vadd.f32 %v1968, %v2031
    %v2037 = vadd.f32 %v1969, %v2034
    %v2038 = vld [vmem:[%s5] sm:$0x1]
    %v2040 = vperm.slane %v2038, 0
    %v2042 = vadd.f32 %v2036, %v2040
    %v2043 = vadd.f32 %v2037, %v2040
    %v2044 = vmax.f32 %v2042, 0.0
    %v2045 = vmax.f32 %v2043, 0.0
    %vm2046 = vcmask 523264
    %2047 = vst.msk [vmem:[#allocation2] sm:$0xff] %vm2046, %v2044
    %2048 = vst.msk [vmem:[#allocation2 + $0x8] sm:$0xff] %vm2046, %v2045
    %v2049 = vld [vmem:[%s7] sm:$0x1]
    %v2050 = vld [vmem:[#allocation2] sm:$0x1]
    %v2051 = vld [vmem:[%s6] sm:$0xff]
    %v2052 = vld [vmem:[%s6 + $0x8] sm:$0xff]
    %v2053 = vld [vmem:[%s6 + $0x10] sm:$0xff]
    %v2054 = vld [vmem:[%s6 + $0x18] sm:$0xff]
    %v2055 = vld [vmem:[%s6 + $0x20] sm:$0xff]
    %v2056 = vld [vmem:[%s6 + $0x28] sm:$0xff]
    %v2057 = vld [vmem:[%s6 + $0x30] sm:$0xff]
    %v2058 = vld [vmem:[%s6 + $0x38] sm:$0xff]
    %v2060 = vsel %vm2046, %v2050, 0
    %2062 = vmatpush.msra.mxu0 0.0
    %2063 = vmatpush.msra.mxu0 0.0
    %2064 = vmatpush.msra.mxu0 0.0
    %2065 = vmatpush.msra.mxu0 0.0
    %2066 = vmatpush.msra.mxu0 0.0
    %2067 = vmatpush.msra.mxu0 0.0
    %2068 = vmatpush.msra.mxu0 0.0
    %2069 = vmatpush.msra.mxu0 0.0
    %2070 = vmatpush.msra.mxu0 %v2058
    %2071 = vmatpush.msra.mxu0 %v2057
    %2072 = vmatpush.msra.mxu0 %v2056
    %2073 = vmatpush.msra.mxu0 %v2055
    %2074 = vmatpush.msra.mxu0 %v2054
    %2075 = vmatpush.msra.mxu0 %v2053
    %2076 = vmatpush.msra.mxu0 %v2052
    %2077 = vmatpush.msra.mxu0 %v2051
    %2078 = vmatmul.f32.gmra.mxu0 %v2060
    %v2079 = vpop.f32.mrf.mxu0
    %v2080 = vadd.f32 0.0, %v2079
    %2081 = vdwg.mxu0
    %v2082 = vadd.f32 %v2049, %v2080
    %v2083 = vld [vmem:[#allocation2 + $0x1] sm:$0x1]
    %s2084 = scalar_lea.vmem %s6, 64
    %v2085 = vld [vmem:[%s2084] sm:$0xff]
    %v2086 = vld [vmem:[%s2084 + $0x8] sm:$0xff]
    %v2087 = vld [vmem:[%s2084 + $0x10] sm:$0xff]
    %v2088 = vld [vmem:[%s2084 + $0x18] sm:$0xff]
    %v2089 = vld [vmem:[%s2084 + $0x20] sm:$0xff]
    %v2090 = vld [vmem:[%s2084 + $0x28] sm:$0xff]
    %v2091 = vld [vmem:[%s2084 + $0x30] sm:$0xff]
    %v2092 = vld [vmem:[%s2084 + $0x38] sm:$0xff]
    %v2094 = vsel %vm2046, %v2083, 0
    %2096 = vmatpush.msra.mxu0 0.0
    %2097 = vmatpush.msra.mxu0 0.0
    %2098 = vmatpush.msra.mxu0 0.0
    %2099 = vmatpush.msra.mxu0 0.0
    %2100 = vmatpush.msra.mxu0 0.0
    %2101 = vmatpush.msra.mxu0 0.0
    %2102 = vmatpush.msra.mxu0 0.0
    %2103 = vmatpush.msra.mxu0 0.0
    %2104 = vmatpush.msra.mxu0 %v2092
    %2105 = vmatpush.msra.mxu0 %v2091
    %2106 = vmatpush.msra.mxu0 %v2090
    %2107 = vmatpush.msra.mxu0 %v2089
    %2108 = vmatpush.msra.mxu0 %v2088
    %2109 = vmatpush.msra.mxu0 %v2087
    %2110 = vmatpush.msra.mxu0 %v2086
    %2111 = vmatpush.msra.mxu0 %v2085
    %2112 = vmatmul.f32.gmra.mxu0 %v2094
    %v2113 = vpop.f32.mrf.mxu0
    %v2114 = vadd.f32 0.0, %v2113
    %2115 = vdwg.mxu0
    %v2116 = vadd.f32 %v2082, %v2114
    %v2117 = vld [vmem:[#allocation2 + $0x2] sm:$0x1]
    %s2118 = scalar_lea.vmem %s6, 128
    %v2119 = vld [vmem:[%s2118] sm:$0xff]
    %v2120 = vld [vmem:[%s2118 + $0x8] sm:$0xff]
    %v2121 = vld [vmem:[%s2118 + $0x10] sm:$0xff]
    %v2122 = vld [vmem:[%s2118 + $0x18] sm:$0xff]
    %v2123 = vld [vmem:[%s2118 + $0x20] sm:$0xff]
    %v2124 = vld [vmem:[%s2118 + $0x28] sm:$0xff]
    %v2125 = vld [vmem:[%s2118 + $0x30] sm:$0xff]
    %v2126 = vld [vmem:[%s2118 + $0x38] sm:$0xff]
    %v2128 = vsel %vm2046, %v2117, 0
    %2130 = vmatpush.msra.mxu0 0.0
    %2131 = vmatpush.msra.mxu0 0.0
    %2132 = vmatpush.msra.mxu0 0.0
    %2133 = vmatpush.msra.mxu0 0.0
    %2134 = vmatpush.msra.mxu0 0.0
    %2135 = vmatpush.msra.mxu0 0.0
    %2136 = vmatpush.msra.mxu0 0.0
    %2137 = vmatpush.msra.mxu0 0.0
    %2138 = vmatpush.msra.mxu0 %v2126
    %2139 = vmatpush.msra.mxu0 %v2125
    %2140 = vmatpush.msra.mxu0 %v2124
    %2141 = vmatpush.msra.mxu0 %v2123
    %2142 = vmatpush.msra.mxu0 %v2122
    %2143 = vmatpush.msra.mxu0 %v2121
    %2144 = vmatpush.msra.mxu0 %v2120
    %2145 = vmatpush.msra.mxu0 %v2119
    %2146 = vmatmul.f32.gmra.mxu0 %v2128
    %v2147 = vpop.f32.mrf.mxu0
    %v2148 = vadd.f32 0.0, %v2147
    %2149 = vdwg.mxu0
    %v2150 = vadd.f32 %v2116, %v2148
    %v2151 = vld [vmem:[#allocation2 + $0x3] sm:$0x1]
    %s2152 = scalar_lea.vmem %s6, 192
    %v2153 = vld [vmem:[%s2152] sm:$0xff]
    %v2154 = vld [vmem:[%s2152 + $0x8] sm:$0xff]
    %v2155 = vld [vmem:[%s2152 + $0x10] sm:$0xff]
    %v2156 = vld [vmem:[%s2152 + $0x18] sm:$0xff]
    %v2157 = vld [vmem:[%s2152 + $0x20] sm:$0xff]
    %v2158 = vld [vmem:[%s2152 + $0x28] sm:$0xff]
    %v2159 = vld [vmem:[%s2152 + $0x30] sm:$0xff]
    %v2160 = vld [vmem:[%s2152 + $0x38] sm:$0xff]
    %v2162 = vsel %vm2046, %v2151, 0
    %2164 = vmatpush.msra.mxu0 0.0
    %2165 = vmatpush.msra.mxu0 0.0
    %2166 = vmatpush.msra.mxu0 0.0
    %2167 = vmatpush.msra.mxu0 0.0
    %2168 = vmatpush.msra.mxu0 0.0
    %2169 = vmatpush.msra.mxu0 0.0
    %2170 = vmatpush.msra.mxu0 0.0
    %2171 = vmatpush.msra.mxu0 0.0
    %2172 = vmatpush.msra.mxu0 %v2160
    %2173 = vmatpush.msra.mxu0 %v2159
    %2174 = vmatpush.msra.mxu0 %v2158
    %2175 = vmatpush.msra.mxu0 %v2157
    %2176 = vmatpush.msra.mxu0 %v2156
    %2177 = vmatpush.msra.mxu0 %v2155
    %2178 = vmatpush.msra.mxu0 %v2154
    %2179 = vmatpush.msra.mxu0 %v2153
    %2180 = vmatmul.f32.gmra.mxu0 %v2162
    %v2181 = vpop.f32.mrf.mxu0
    %v2182 = vadd.f32 0.0, %v2181
    %2183 = vdwg.mxu0
    %v2184 = vadd.f32 %v2150, %v2182
    %v2185 = vld [vmem:[#allocation2 + $0x4] sm:$0x1]
    %s2186 = scalar_lea.vmem %s6, 256
    %v2187 = vld [vmem:[%s2186] sm:$0xff]
    %v2188 = vld [vmem:[%s2186 + $0x8] sm:$0xff]
    %v2189 = vld [vmem:[%s2186 + $0x10] sm:$0xff]
    %v2190 = vld [vmem:[%s2186 + $0x18] sm:$0xff]
    %v2191 = vld [vmem:[%s2186 + $0x20] sm:$0xff]
    %v2192 = vld [vmem:[%s2186 + $0x28] sm:$0xff]
    %v2193 = vld [vmem:[%s2186 + $0x30] sm:$0xff]
    %v2194 = vld [vmem:[%s2186 + $0x38] sm:$0xff]
    %v2196 = vsel %vm2046, %v2185, 0
    %2198 = vmatpush.msra.mxu0 0.0
    %2199 = vmatpush.msra.mxu0 0.0
    %2200 = vmatpush.msra.mxu0 0.0
    %2201 = vmatpush.msra.mxu0 0.0
    %2202 = vmatpush.msra.mxu0 0.0
    %2203 = vmatpush.msra.mxu0 0.0
    %2204 = vmatpush.msra.mxu0 0.0
    %2205 = vmatpush.msra.mxu0 0.0
    %2206 = vmatpush.msra.mxu0 %v2194
    %2207 = vmatpush.msra.mxu0 %v2193
    %2208 = vmatpush.msra.mxu0 %v2192
    %2209 = vmatpush.msra.mxu0 %v2191
    %2210 = vmatpush.msra.mxu0 %v2190
    %2211 = vmatpush.msra.mxu0 %v2189
    %2212 = vmatpush.msra.mxu0 %v2188
    %2213 = vmatpush.msra.mxu0 %v2187
    %2214 = vmatmul.f32.gmra.mxu0 %v2196
    %v2215 = vpop.f32.mrf.mxu0
    %v2216 = vadd.f32 0.0, %v2215
    %2217 = vdwg.mxu0
    %v2218 = vadd.f32 %v2184, %v2216
    %v2219 = vld [vmem:[#allocation2 + $0x5] sm:$0x1]
    %s2220 = scalar_lea.vmem %s6, 320
    %v2221 = vld [vmem:[%s2220] sm:$0xff]
    %v2222 = vld [vmem:[%s2220 + $0x8] sm:$0xff]
    %v2223 = vld [vmem:[%s2220 + $0x10] sm:$0xff]
    %v2224 = vld [vmem:[%s2220 + $0x18] sm:$0xff]
    %v2225 = vld [vmem:[%s2220 + $0x20] sm:$0xff]
    %v2226 = vld [vmem:[%s2220 + $0x28] sm:$0xff]
    %v2227 = vld [vmem:[%s2220 + $0x30] sm:$0xff]
    %v2228 = vld [vmem:[%s2220 + $0x38] sm:$0xff]
    %v2230 = vsel %vm2046, %v2219, 0
    %2232 = vmatpush.msra.mxu0 0.0
    %2233 = vmatpush.msra.mxu0 0.0
    %2234 = vmatpush.msra.mxu0 0.0
    %2235 = vmatpush.msra.mxu0 0.0
    %2236 = vmatpush.msra.mxu0 0.0
    %2237 = vmatpush.msra.mxu0 0.0
    %2238 = vmatpush.msra.mxu0 0.0
    %2239 = vmatpush.msra.mxu0 0.0
    %2240 = vmatpush.msra.mxu0 %v2228
    %2241 = vmatpush.msra.mxu0 %v2227
    %2242 = vmatpush.msra.mxu0 %v2226
    %2243 = vmatpush.msra.mxu0 %v2225
    %2244 = vmatpush.msra.mxu0 %v2224
    %2245 = vmatpush.msra.mxu0 %v2223
    %2246 = vmatpush.msra.mxu0 %v2222
    %2247 = vmatpush.msra.mxu0 %v2221
    %2248 = vmatmul.f32.gmra.mxu0 %v2230
    %v2249 = vpop.f32.mrf.mxu0
    %v2250 = vadd.f32 0.0, %v2249
    %2251 = vdwg.mxu0
    %v2252 = vadd.f32 %v2218, %v2250
    %v2253 = vld [vmem:[#allocation2 + $0x6] sm:$0x1]
    %s2254 = scalar_lea.vmem %s6, 384
    %v2255 = vld [vmem:[%s2254] sm:$0xff]
    %v2256 = vld [vmem:[%s2254 + $0x8] sm:$0xff]
    %v2257 = vld [vmem:[%s2254 + $0x10] sm:$0xff]
    %v2258 = vld [vmem:[%s2254 + $0x18] sm:$0xff]
    %v2259 = vld [vmem:[%s2254 + $0x20] sm:$0xff]
    %v2260 = vld [vmem:[%s2254 + $0x28] sm:$0xff]
    %v2261 = vld [vmem:[%s2254 + $0x30] sm:$0xff]
    %v2262 = vld [vmem:[%s2254 + $0x38] sm:$0xff]
    %v2264 = vsel %vm2046, %v2253, 0
    %2266 = vmatpush.msra.mxu0 0.0
    %2267 = vmatpush.msra.mxu0 0.0
    %2268 = vmatpush.msra.mxu0 0.0
    %2269 = vmatpush.msra.mxu0 0.0
    %2270 = vmatpush.msra.mxu0 0.0
    %2271 = vmatpush.msra.mxu0 0.0
    %2272 = vmatpush.msra.mxu0 0.0
    %2273 = vmatpush.msra.mxu0 0.0
    %2274 = vmatpush.msra.mxu0 %v2262
    %2275 = vmatpush.msra.mxu0 %v2261
    %2276 = vmatpush.msra.mxu0 %v2260
    %2277 = vmatpush.msra.mxu0 %v2259
    %2278 = vmatpush.msra.mxu0 %v2258
    %2279 = vmatpush.msra.mxu0 %v2257
    %2280 = vmatpush.msra.mxu0 %v2256
    %2281 = vmatpush.msra.mxu0 %v2255
    %2282 = vmatmul.f32.gmra.mxu0 %v2264
    %v2283 = vpop.f32.mrf.mxu0
    %v2284 = vadd.f32 0.0, %v2283
    %2285 = vdwg.mxu0
    %v2286 = vadd.f32 %v2252, %v2284
    %v2287 = vld [vmem:[#allocation2 + $0x7] sm:$0x1]
    %s2288 = scalar_lea.vmem %s6, 448
    %v2289 = vld [vmem:[%s2288] sm:$0xff]
    %v2290 = vld [vmem:[%s2288 + $0x8] sm:$0xff]
    %v2291 = vld [vmem:[%s2288 + $0x10] sm:$0xff]
    %v2292 = vld [vmem:[%s2288 + $0x18] sm:$0xff]
    %v2293 = vld [vmem:[%s2288 + $0x20] sm:$0xff]
    %v2294 = vld [vmem:[%s2288 + $0x28] sm:$0xff]
    %v2295 = vld [vmem:[%s2288 + $0x30] sm:$0xff]
    %v2296 = vld [vmem:[%s2288 + $0x38] sm:$0xff]
    %v2298 = vsel %vm2046, %v2287, 0
    %2300 = vmatpush.msra.mxu0 0.0
    %2301 = vmatpush.msra.mxu0 0.0
    %2302 = vmatpush.msra.mxu0 0.0
    %2303 = vmatpush.msra.mxu0 0.0
    %2304 = vmatpush.msra.mxu0 0.0
    %2305 = vmatpush.msra.mxu0 0.0
    %2306 = vmatpush.msra.mxu0 0.0
    %2307 = vmatpush.msra.mxu0 0.0
    %2308 = vmatpush.msra.mxu0 %v2296
    %2309 = vmatpush.msra.mxu0 %v2295
    %2310 = vmatpush.msra.mxu0 %v2294
    %2311 = vmatpush.msra.mxu0 %v2293
    %2312 = vmatpush.msra.mxu0 %v2292
    %2313 = vmatpush.msra.mxu0 %v2291
    %2314 = vmatpush.msra.mxu0 %v2290
    %2315 = vmatpush.msra.mxu0 %v2289
    %2316 = vmatmul.f32.gmra.mxu0 %v2298
    %v2317 = vpop.f32.mrf.mxu0
    %v2318 = vadd.f32 0.0, %v2317
    %2319 = vdwg.mxu0
    %v2320 = vadd.f32 %v2286, %v2318
    %v2321 = vld [vmem:[#allocation2 + $0x8] sm:$0x1]
    %s2322 = scalar_lea.vmem %s6, 512
    %v2323 = vld [vmem:[%s2322] sm:$0xff]
    %v2324 = vld [vmem:[%s2322 + $0x8] sm:$0xff]
    %v2325 = vld [vmem:[%s2322 + $0x10] sm:$0xff]
    %v2326 = vld [vmem:[%s2322 + $0x18] sm:$0xff]
    %v2327 = vld [vmem:[%s2322 + $0x20] sm:$0xff]
    %v2328 = vld [vmem:[%s2322 + $0x28] sm:$0xff]
    %v2329 = vld [vmem:[%s2322 + $0x30] sm:$0xff]
    %v2330 = vld [vmem:[%s2322 + $0x38] sm:$0xff]
    %v2332 = vsel %vm2046, %v2321, 0
    %2334 = vmatpush.msra.mxu0 0.0
    %2335 = vmatpush.msra.mxu0 0.0
    %2336 = vmatpush.msra.mxu0 0.0
    %2337 = vmatpush.msra.mxu0 0.0
    %2338 = vmatpush.msra.mxu0 0.0
    %2339 = vmatpush.msra.mxu0 0.0
    %2340 = vmatpush.msra.mxu0 0.0
    %2341 = vmatpush.msra.mxu0 0.0
    %2342 = vmatpush.msra.mxu0 %v2330
    %2343 = vmatpush.msra.mxu0 %v2329
    %2344 = vmatpush.msra.mxu0 %v2328
    %2345 = vmatpush.msra.mxu0 %v2327
    %2346 = vmatpush.msra.mxu0 %v2326
    %2347 = vmatpush.msra.mxu0 %v2325
    %2348 = vmatpush.msra.mxu0 %v2324
    %2349 = vmatpush.msra.mxu0 %v2323
    %2350 = vmatmul.f32.gmra.mxu0 %v2332
    %v2351 = vpop.f32.mrf.mxu0
    %v2352 = vadd.f32 0.0, %v2351
    %2353 = vdwg.mxu0
    %v2354 = vadd.f32 %v2320, %v2352
    %2355 = vst [vmem:[#allocation3] sm:$0x1] %v2354
    // Predicated region
    $region34: #{embedding_net_forward.1} parent=1 // pred_check
      _
    $region35: #{embedding_net_forward.1} parent=1 // pred_check_branch
      %2357 = sbr.rel (0) target = $region37
    $region36: #{embedding_net_forward.1} parent=1 // pred_region
      %2359 = vsyncadd [#allocation4], 0
      %s2361 = sshll.u32 [#allocation3], 4
      %s2362 = int_to_ptr.vmem [resolvable:$true] %s2361
      %s2363 = sshll.u32 %s8, 4
      %s2364 = int_to_ptr.hbm [resolvable:$true] %s2363
      %2366 = dma.vmem_to_hbm [thread:$0]  %s2362, 16, %s2364, [#allocation4]
    $region37: #{embedding_net_forward.1} parent=1 // pred_fallthru
      _
    // Predicated region
    $region38: #{embedding_net_forward.1} parent=1 // pred_check
      _
    $region39: #{embedding_net_forward.1} parent=1 // pred_check_branch
      %2368 = sbr.rel (0) target = $region41
    $region40: #{embedding_net_forward.1} parent=1 // pred_region
      %2370 = dma.done [#allocation4], 16
    $region41: #{embedding_net_forward.1} parent=1 // pred_fallthru
      _
    %2371 = vsyncpa [#allocation4], 1

</llo_original>
